<compile_context>
chip_gen: v7x
topology: tpu7x:2x2x1
jax: 0.10.0
libtpu: 0.0.40
codegen_flags: <defaults>
</compile_context>

<pallas_src>
import functools

import jax
import jax.numpy as jnp
from jax.experimental import pallas as pl
from jax.experimental.pallas import tpu as pltpu

HIDDEN_FEATURES = 100          # real feature width (matches PyTorch module)
PADDED_FEATURES = 128          # lane-dense padded width
NUM_BLOCKS = 9                 # block0 + 4 * (block1, block2)
BN_EPS = 1e-5


def _round_up(x, m):
    return ((x + m - 1) // m) * m


def _vmem_limit_bytes():
    # 75% of physical VMEM (headroom for compiler-internal scratch). Default
    # scoped limits (16 MiB v5e / 32 MiB v6e,v7x) are far below physical.
    try:
        cap = int(pltpu.get_tpu_info().vmem_capacity_bytes)
        return max(32 * 1024 * 1024, (cap * 3) // 4)
    except Exception:
        return 48 * 1024 * 1024


# ----------------------------------------------------------------------------
# Fused backbone kernel
# ----------------------------------------------------------------------------
def _backbone_kernel(x_ref, w0_ref, wh_ref, gamma_ref, beta_ref, o_ref):
    # x:     (N, Fp)           bf16   (Fp = input features padded to 128k)
    # w0:    (Fp, 128)         bf16
    # wh:    (8, 128, 128)     bf16   (weights for blocks 1..8)
    # gamma: (9, 1, 128)       f32
    # beta:  (9, 1, 128)       f32
    # o:     (N, 128)          f32
    n = x_ref.shape[0]
    inv_n = jnp.float32(1.0 / n)

    def matmul(h_bf16, w_bf16):
        # MXU matmul with bf16 operands, f32 accumulation.
        return jnp.dot(h_bf16, w_bf16, preferred_element_type=jnp.float32)

    def bn_act(y, idx, res=None):
        # Folded BatchNorm (training-mode batch stats, biased var) + residual
        # + ReLU, all in f32.  One sweep over y for the stats; scale/shift
        # live on tiny (1, 128) vectors; the big (N, 128) tile only sees
        # y*scale + shift (+ res) and max.
        mean = jnp.sum(y, axis=0, keepdims=True) * inv_n
        var = jnp.maximum(
            jnp.sum(y * y, axis=0, keepdims=True) * inv_n - mean * mean, 0.0)
        scale = gamma_ref[idx] * jax.lax.rsqrt(var + BN_EPS)   # (1, 128)
        shift = beta_ref[idx] - mean * scale                   # (1, 128)
        z = y * scale + shift
        if res is not None:
            z = z + res
        return jnp.maximum(z, 0.0)                             # f32

    # block0
    h32 = bn_act(matmul(x_ref[...], w0_ref[...]), 0)
    h = h32.astype(jnp.bfloat16)                 # bf16-resident activation

    # 4 residual blocks: block1 (no residual), block2 (adds x0) each.
    idx = 1
    for _ in range(4):
        x0 = h                                   # residual, bf16-resident
        h = bn_act(matmul(h, wh_ref[idx - 1]), idx).astype(jnp.bfloat16)
        idx += 1
        h32 = bn_act(matmul(h, wh_ref[idx - 1]), idx,
                     res=x0.astype(jnp.float32))
        h = h32.astype(jnp.bfloat16)
        idx += 1

    # Final block output stored f32, lane-dense 128 wide.
    o_ref[...] = h32


# ----------------------------------------------------------------------------
# Wrapper
# ----------------------------------------------------------------------------
def _full_spec(shape):
    zeros = (0,) * len(shape)
    return pl.BlockSpec(shape, lambda i, _z=zeros: _z)


def mlp_backbone(x, params, return_padded=False):
    """MLPBackbone.forward — single fused Pallas call.

    Returns (N, 100) by default.  With return_padded=True returns the
    kernel's lane-dense (N, 128) output directly (padded lanes are exactly
    zero), avoiding the extra XLA slice pass over the output.
    """
    w0, wh, gammas, betas = params
    n, fin = x.shape
    fin_p = w0.shape[0]
    assert fin <= fin_p, (fin, fin_p)
    if fin < fin_p:                               # lane-dense input load
        x = jnp.pad(x, ((0, 0), (0, fin_p - fin)))
    x = x.astype(jnp.bfloat16)

    args = (x, w0, wh, gammas, betas)
    out = pl.pallas_call(
        _backbone_kernel,
        out_shape=jax.ShapeDtypeStruct((n, PADDED_FEATURES), jnp.float32),
        grid=(1,),
        in_specs=[_full_spec(a.shape) for a in args],
        out_specs=_full_spec((n, PADDED_FEATURES)),
        compiler_params=pltpu.CompilerParams(
            dimension_semantics=("arbitrary",),
            vmem_limit_bytes=_vmem_limit_bytes()),
    )(*args)
    return out if return_padded else out[:, :HIDDEN_FEATURES]


# Pure-JAX reference mirroring the kernel math (for a correctness check).
def mlp_backbone_reference(x, params):
    w0, wh, gammas, betas = params
    fin_p = w0.shape[0]
    x = jnp.pad(x, ((0, 0), (0, fin_p - x.shape[1]))).astype(jnp.bfloat16)

    def matmul(h, w):
        return jnp.dot(h, w, preferred_element_type=jnp.float32)

    def bn_act(y, idx, res=None):
        mean = jnp.mean(y, axis=0, keepdims=True)
        var = jnp.maximum(
            jnp.mean(y * y, axis=0, keepdims=True) - mean * mean, 0.0)
        scale = gammas[idx] * jax.lax.rsqrt(var + BN_EPS)
        shift = betas[idx] - mean * scale
        z = y * scale + shift
        if res is not None:
            z = z + res
        return jnp.maximum(z, 0.0)

    h32 = bn_act(matmul(x, w0), 0)
    h = h32.astype(jnp.bfloat16)
    idx = 1
    for _ in range(4):
        x0 = h
        h = bn_act(matmul(h, wh[idx - 1]), idx).astype(jnp.bfloat16)
        idx += 1
        h32 = bn_act(matmul(h, wh[idx - 1]), idx, res=x0.astype(jnp.float32))
        h = h32.astype(jnp.bfloat16)
        idx += 1
    return h32[:, :HIDDEN_FEATURES]


# ----------------------------------------------------------------------------
# Deterministic parameter initialization (kaiming_uniform weights, BN affine).
# Linear bias is omitted: it is cancelled exactly by training-mode BatchNorm.
# ----------------------------------------------------------------------------
def init_params(key, input_features):
    keys = jax.random.split(key, NUM_BLOCKS)
    col_pad = PADDED_FEATURES - HIDDEN_FEATURES
    fin_p = _round_up(input_features, 128)

    def kaiming(k, fan_in):
        bound = jnp.sqrt(6.0 / fan_in)
        return jax.random.uniform(k, (fan_in, HIDDEN_FEATURES), jnp.float32,
                                  -bound, bound)

    # block0 weight: (Fin, 100) -> zero-pad rows & cols -> (Fin_p, 128), bf16
    w0 = jnp.pad(kaiming(keys[0], input_features),
                 ((0, fin_p - input_features),
                  (0, col_pad))).astype(jnp.bfloat16)

    # blocks 1..8: (100, 100) -> zero-pad rows & cols -> (128, 128), bf16
    whs = []
    for i in range(1, NUM_BLOCKS):
        w = jnp.pad(kaiming(keys[i], HIDDEN_FEATURES),
                    ((0, col_pad), (0, col_pad))).astype(jnp.bfloat16)
        whs.append(w)
    wh = jnp.stack(whs, axis=0)

    # BatchNorm affine: gamma = 1 on real lanes, 0 on padded; beta = 0.
    gamma_row = jnp.concatenate(
        [jnp.ones((HIDDEN_FEATURES,), jnp.float32),
         jnp.zeros((col_pad,), jnp.float32)])
    gammas = jnp.tile(gamma_row[None, None, :], (NUM_BLOCKS, 1, 1))
    betas = jnp.zeros((NUM_BLOCKS, 1, PADDED_FEATURES), jnp.float32)

    return (w0, wh, gammas, betas)


# ----------------------------------------------------------------------------
if __name__ == "__main__":
    key = jax.random.PRNGKey(0)
    k_param, k_x = jax.random.split(key)

    batch = 8
    input_features = 32

    params = init_params(k_param, input_features)
    x = jax.random.normal(k_x, (batch, input_features), jnp.float32)

    out = jax.jit(functools.partial(mlp_backbone, params=params))(x)
    out = jax.block_until_ready(out)

    assert out.shape == (batch, HIDDEN_FEATURES), out.shape
    assert jnp.all(jnp.isfinite(out)), "non-finite output"

    ref = mlp_backbone_reference(x, params)
    assert jnp.allclose(out, ref, atol=1e-2, rtol=1e-2), \
        float(jnp.max(jnp.abs(out - ref)))

    print("KERNEL_OK")
</pallas_src>

<mosaic_0001>
module attributes {stable_mosaic.version = 11 : i64} {
  func.func @_backbone_kernel(%arg0: i32, %arg1: memref<8x128xbf16, #tpu.memory_space<vmem>>, %arg2: memref<128x128xbf16, #tpu.memory_space<vmem>>, %arg3: memref<8x128x128xbf16, #tpu.memory_space<vmem>>, %arg4: memref<9x1x128xf32, #tpu.memory_space<vmem>>, %arg5: memref<9x1x128xf32, #tpu.memory_space<vmem>>, %arg6: memref<8x128xf32, #tpu.memory_space<vmem>>) attributes {dimension_semantics = [#tpu.dimension_semantics<arbitrary>], iteration_bounds = array<i64: 1>, scalar_prefetch = 0 : i64, scratch_operands = 0 : i64, tpu.core_type = #tpu.core_type<tc>, window_params = [{pipeline_mode = #tpu.pipeline_mode<synchronous>, transform_indices = @transform_0, window_bounds = array<i64: 8, 128>}, {pipeline_mode = #tpu.pipeline_mode<synchronous>, transform_indices = @transform_1, window_bounds = array<i64: 128, 128>}, {pipeline_mode = #tpu.pipeline_mode<synchronous>, transform_indices = @transform_2, window_bounds = array<i64: 8, 128, 128>}, {pipeline_mode = #tpu.pipeline_mode<synchronous>, transform_indices = @transform_3, window_bounds = array<i64: 9, 1, 128>}, {pipeline_mode = #tpu.pipeline_mode<synchronous>, transform_indices = @transform_4, window_bounds = array<i64: 9, 1, 128>}, {pipeline_mode = #tpu.pipeline_mode<synchronous>, transform_indices = @transform_5, window_bounds = array<i64: 8, 128>}]} {
    %c0 = arith.constant 0 : index
    %c0_0 = arith.constant 0 : index
    %0 = vector.load %arg1[%c0, %c0_0] : memref<8x128xbf16, #tpu.memory_space<vmem>>, vector<8x128xbf16>
    %c0_1 = arith.constant 0 : index
    %c0_2 = arith.constant 0 : index
    %1 = vector.load %arg2[%c0_1, %c0_2] : memref<128x128xbf16, #tpu.memory_space<vmem>>, vector<128x128xbf16>
    %cst = arith.constant dense<0.000000e+00> : vector<8x128xf32>
    %2 = tpu.matmul %0, %1, %cst {dimension_numbers = #tpu.dot_dimension_numbers<[1], [0], [0], [1], [0, 0, 1, 1], [], []>} : vector<8x128xbf16>, vector<128x128xbf16>, vector<8x128xf32> -> vector<8x128xf32>
    %cst_3 = arith.constant dense<0.000000e+00> : vector<128xf32>
    %3 = vector.multi_reduction <add>, %2, %cst_3 [0] : vector<8x128xf32> to vector<128xf32>
    %4 = vector.shape_cast %3 : vector<128xf32> to vector<1x128xf32>
    %cst_4 = arith.constant 1.250000e-01 : f32
    %5 = vector.broadcast %cst_4 : f32 to vector<1x128xf32>
    %6 = arith.mulf %4, %5 : vector<1x128xf32>
    %7 = arith.mulf %2, %2 : vector<8x128xf32>
    %cst_5 = arith.constant dense<0.000000e+00> : vector<128xf32>
    %8 = vector.multi_reduction <add>, %7, %cst_5 [0] : vector<8x128xf32> to vector<128xf32>
    %9 = vector.shape_cast %8 : vector<128xf32> to vector<1x128xf32>
    %cst_6 = arith.constant 1.250000e-01 : f32
    %10 = vector.broadcast %cst_6 : f32 to vector<1x128xf32>
    %11 = arith.mulf %9, %10 : vector<1x128xf32>
    %12 = arith.mulf %6, %6 : vector<1x128xf32>
    %13 = arith.subf %11, %12 : vector<1x128xf32>
    %cst_7 = arith.constant 0.000000e+00 : f32
    %14 = vector.broadcast %cst_7 : f32 to vector<1x128xf32>
    %15 = arith.maximumf %13, %14 : vector<1x128xf32>
    %c0_8 = arith.constant 0 : index
    %c0_9 = arith.constant 0 : index
    %c0_10 = arith.constant 0 : index
    %16 = vector.load %arg4[%c0_8, %c0_9, %c0_10] : memref<9x1x128xf32, #tpu.memory_space<vmem>>, vector<1x1x128xf32>
    %17 = vector.shape_cast %16 : vector<1x1x128xf32> to vector<1x128xf32>
    %cst_11 = arith.constant 9.99999974E-6 : f32
    %18 = vector.broadcast %cst_11 : f32 to vector<1x128xf32>
    %19 = arith.addf %15, %18 : vector<1x128xf32>
    %20 = math.rsqrt %19 : vector<1x128xf32>
    %21 = arith.mulf %17, %20 : vector<1x128xf32>
    %c0_12 = arith.constant 0 : index
    %c0_13 = arith.constant 0 : index
    %c0_14 = arith.constant 0 : index
    %22 = vector.load %arg5[%c0_12, %c0_13, %c0_14] : memref<9x1x128xf32, #tpu.memory_space<vmem>>, vector<1x1x128xf32>
    %23 = vector.shape_cast %22 : vector<1x1x128xf32> to vector<1x128xf32>
    %24 = arith.mulf %6, %21 : vector<1x128xf32>
    %25 = arith.subf %23, %24 : vector<1x128xf32>
    %26 = vector.broadcast %21 : vector<1x128xf32> to vector<8x128xf32>
    %27 = arith.mulf %2, %26 : vector<8x128xf32>
    %28 = vector.broadcast %25 : vector<1x128xf32> to vector<8x128xf32>
    %29 = arith.addf %27, %28 : vector<8x128xf32>
    %cst_15 = arith.constant 0.000000e+00 : f32
    %30 = vector.broadcast %cst_15 : f32 to vector<8x128xf32>
    %31 = arith.maximumf %29, %30 : vector<8x128xf32>
    %32 = arith.truncf %31 : vector<8x128xf32> to vector<8x128xbf16>
    %c0_16 = arith.constant 0 : index
    %c0_17 = arith.constant 0 : index
    %c0_18 = arith.constant 0 : index
    %33 = vector.load %arg3[%c0_16, %c0_17, %c0_18] : memref<8x128x128xbf16, #tpu.memory_space<vmem>>, vector<1x128x128xbf16>
    %34 = vector.shape_cast %33 : vector<1x128x128xbf16> to vector<128x128xbf16>
    %cst_19 = arith.constant dense<0.000000e+00> : vector<8x128xf32>
    %35 = tpu.matmul %32, %34, %cst_19 {dimension_numbers = #tpu.dot_dimension_numbers<[1], [0], [0], [1], [0, 0, 1, 1], [], []>} : vector<8x128xbf16>, vector<128x128xbf16>, vector<8x128xf32> -> vector<8x128xf32>
    %cst_20 = arith.constant dense<0.000000e+00> : vector<128xf32>
    %36 = vector.multi_reduction <add>, %35, %cst_20 [0] : vector<8x128xf32> to vector<128xf32>
    %37 = vector.shape_cast %36 : vector<128xf32> to vector<1x128xf32>
    %cst_21 = arith.constant 1.250000e-01 : f32
    %38 = vector.broadcast %cst_21 : f32 to vector<1x128xf32>
    %39 = arith.mulf %37, %38 : vector<1x128xf32>
    %40 = arith.mulf %35, %35 : vector<8x128xf32>
    %cst_22 = arith.constant dense<0.000000e+00> : vector<128xf32>
    %41 = vector.multi_reduction <add>, %40, %cst_22 [0] : vector<8x128xf32> to vector<128xf32>
    %42 = vector.shape_cast %41 : vector<128xf32> to vector<1x128xf32>
    %cst_23 = arith.constant 1.250000e-01 : f32
    %43 = vector.broadcast %cst_23 : f32 to vector<1x128xf32>
    %44 = arith.mulf %42, %43 : vector<1x128xf32>
    %45 = arith.mulf %39, %39 : vector<1x128xf32>
    %46 = arith.subf %44, %45 : vector<1x128xf32>
    %cst_24 = arith.constant 0.000000e+00 : f32
    %47 = vector.broadcast %cst_24 : f32 to vector<1x128xf32>
    %48 = arith.maximumf %46, %47 : vector<1x128xf32>
    %c1 = arith.constant 1 : index
    %c0_25 = arith.constant 0 : index
    %c0_26 = arith.constant 0 : index
    %49 = vector.load %arg4[%c1, %c0_25, %c0_26] : memref<9x1x128xf32, #tpu.memory_space<vmem>>, vector<1x1x128xf32>
    %50 = vector.shape_cast %49 : vector<1x1x128xf32> to vector<1x128xf32>
    %cst_27 = arith.constant 9.99999974E-6 : f32
    %51 = vector.broadcast %cst_27 : f32 to vector<1x128xf32>
    %52 = arith.addf %48, %51 : vector<1x128xf32>
    %53 = math.rsqrt %52 : vector<1x128xf32>
    %54 = arith.mulf %50, %53 : vector<1x128xf32>
    %c1_28 = arith.constant 1 : index
    %c0_29 = arith.constant 0 : index
    %c0_30 = arith.constant 0 : index
    %55 = vector.load %arg5[%c1_28, %c0_29, %c0_30] : memref<9x1x128xf32, #tpu.memory_space<vmem>>, vector<1x1x128xf32>
    %56 = vector.shape_cast %55 : vector<1x1x128xf32> to vector<1x128xf32>
    %57 = arith.mulf %39, %54 : vector<1x128xf32>
    %58 = arith.subf %56, %57 : vector<1x128xf32>
    %59 = vector.broadcast %54 : vector<1x128xf32> to vector<8x128xf32>
    %60 = arith.mulf %35, %59 : vector<8x128xf32>
    %61 = vector.broadcast %58 : vector<1x128xf32> to vector<8x128xf32>
    %62 = arith.addf %60, %61 : vector<8x128xf32>
    %cst_31 = arith.constant 0.000000e+00 : f32
    %63 = vector.broadcast %cst_31 : f32 to vector<8x128xf32>
    %64 = arith.maximumf %62, %63 : vector<8x128xf32>
    %65 = arith.truncf %64 : vector<8x128xf32> to vector<8x128xbf16>
    %c1_32 = arith.constant 1 : index
    %c0_33 = arith.constant 0 : index
    %c0_34 = arith.constant 0 : index
    %66 = vector.load %arg3[%c1_32, %c0_33, %c0_34] : memref<8x128x128xbf16, #tpu.memory_space<vmem>>, vector<1x128x128xbf16>
    %67 = vector.shape_cast %66 : vector<1x128x128xbf16> to vector<128x128xbf16>
    %cst_35 = arith.constant dense<0.000000e+00> : vector<8x128xf32>
    %68 = tpu.matmul %65, %67, %cst_35 {dimension_numbers = #tpu.dot_dimension_numbers<[1], [0], [0], [1], [0, 0, 1, 1], [], []>} : vector<8x128xbf16>, vector<128x128xbf16>, vector<8x128xf32> -> vector<8x128xf32>
    %69 = arith.extf %32 : vector<8x128xbf16> to vector<8x128xf32>
    %cst_36 = arith.constant dense<0.000000e+00> : vector<128xf32>
    %70 = vector.multi_reduction <add>, %68, %cst_36 [0] : vector<8x128xf32> to vector<128xf32>
    %71 = vector.shape_cast %70 : vector<128xf32> to vector<1x128xf32>
    %cst_37 = arith.constant 1.250000e-01 : f32
    %72 = vector.broadcast %cst_37 : f32 to vector<1x128xf32>
    %73 = arith.mulf %71, %72 : vector<1x128xf32>
    %74 = arith.mulf %68, %68 : vector<8x128xf32>
    %cst_38 = arith.constant dense<0.000000e+00> : vector<128xf32>
    %75 = vector.multi_reduction <add>, %74, %cst_38 [0] : vector<8x128xf32> to vector<128xf32>
    %76 = vector.shape_cast %75 : vector<128xf32> to vector<1x128xf32>
    %cst_39 = arith.constant 1.250000e-01 : f32
    %77 = vector.broadcast %cst_39 : f32 to vector<1x128xf32>
    %78 = arith.mulf %76, %77 : vector<1x128xf32>
    %79 = arith.mulf %73, %73 : vector<1x128xf32>
    %80 = arith.subf %78, %79 : vector<1x128xf32>
    %cst_40 = arith.constant 0.000000e+00 : f32
    %81 = vector.broadcast %cst_40 : f32 to vector<1x128xf32>
    %82 = arith.maximumf %80, %81 : vector<1x128xf32>
    %c2 = arith.constant 2 : index
    %c0_41 = arith.constant 0 : index
    %c0_42 = arith.constant 0 : index
    %83 = vector.load %arg4[%c2, %c0_41, %c0_42] : memref<9x1x128xf32, #tpu.memory_space<vmem>>, vector<1x1x128xf32>
    %84 = vector.shape_cast %83 : vector<1x1x128xf32> to vector<1x128xf32>
    %cst_43 = arith.constant 9.99999974E-6 : f32
    %85 = vector.broadcast %cst_43 : f32 to vector<1x128xf32>
    %86 = arith.addf %82, %85 : vector<1x128xf32>
    %87 = math.rsqrt %86 : vector<1x128xf32>
    %88 = arith.mulf %84, %87 : vector<1x128xf32>
    %c2_44 = arith.constant 2 : index
    %c0_45 = arith.constant 0 : index
    %c0_46 = arith.constant 0 : index
    %89 = vector.load %arg5[%c2_44, %c0_45, %c0_46] : memref<9x1x128xf32, #tpu.memory_space<vmem>>, vector<1x1x128xf32>
    %90 = vector.shape_cast %89 : vector<1x1x128xf32> to vector<1x128xf32>
    %91 = arith.mulf %73, %88 : vector<1x128xf32>
    %92 = arith.subf %90, %91 : vector<1x128xf32>
    %93 = vector.broadcast %88 : vector<1x128xf32> to vector<8x128xf32>
    %94 = arith.mulf %68, %93 : vector<8x128xf32>
    %95 = vector.broadcast %92 : vector<1x128xf32> to vector<8x128xf32>
    %96 = arith.addf %94, %95 : vector<8x128xf32>
    %97 = arith.addf %96, %69 : vector<8x128xf32>
    %cst_47 = arith.constant 0.000000e+00 : f32
    %98 = vector.broadcast %cst_47 : f32 to vector<8x128xf32>
    %99 = arith.maximumf %97, %98 : vector<8x128xf32>
    %100 = arith.truncf %99 : vector<8x128xf32> to vector<8x128xbf16>
    %c2_48 = arith.constant 2 : index
    %c0_49 = arith.constant 0 : index
    %c0_50 = arith.constant 0 : index
    %101 = vector.load %arg3[%c2_48, %c0_49, %c0_50] : memref<8x128x128xbf16, #tpu.memory_space<vmem>>, vector<1x128x128xbf16>
    %102 = vector.shape_cast %101 : vector<1x128x128xbf16> to vector<128x128xbf16>
    %cst_51 = arith.constant dense<0.000000e+00> : vector<8x128xf32>
    %103 = tpu.matmul %100, %102, %cst_51 {dimension_numbers = #tpu.dot_dimension_numbers<[1], [0], [0], [1], [0, 0, 1, 1], [], []>} : vector<8x128xbf16>, vector<128x128xbf16>, vector<8x128xf32> -> vector<8x128xf32>
    %cst_52 = arith.constant dense<0.000000e+00> : vector<128xf32>
    %104 = vector.multi_reduction <add>, %103, %cst_52 [0] : vector<8x128xf32> to vector<128xf32>
    %105 = vector.shape_cast %104 : vector<128xf32> to vector<1x128xf32>
    %cst_53 = arith.constant 1.250000e-01 : f32
    %106 = vector.broadcast %cst_53 : f32 to vector<1x128xf32>
    %107 = arith.mulf %105, %106 : vector<1x128xf32>
    %108 = arith.mulf %103, %103 : vector<8x128xf32>
    %cst_54 = arith.constant dense<0.000000e+00> : vector<128xf32>
    %109 = vector.multi_reduction <add>, %108, %cst_54 [0] : vector<8x128xf32> to vector<128xf32>
    %110 = vector.shape_cast %109 : vector<128xf32> to vector<1x128xf32>
    %cst_55 = arith.constant 1.250000e-01 : f32
    %111 = vector.broadcast %cst_55 : f32 to vector<1x128xf32>
    %112 = arith.mulf %110, %111 : vector<1x128xf32>
    %113 = arith.mulf %107, %107 : vector<1x128xf32>
    %114 = arith.subf %112, %113 : vector<1x128xf32>
    %cst_56 = arith.constant 0.000000e+00 : f32
    %115 = vector.broadcast %cst_56 : f32 to vector<1x128xf32>
    %116 = arith.maximumf %114, %115 : vector<1x128xf32>
    %c3 = arith.constant 3 : index
    %c0_57 = arith.constant 0 : index
    %c0_58 = arith.constant 0 : index
    %117 = vector.load %arg4[%c3, %c0_57, %c0_58] : memref<9x1x128xf32, #tpu.memory_space<vmem>>, vector<1x1x128xf32>
    %118 = vector.shape_cast %117 : vector<1x1x128xf32> to vector<1x128xf32>
    %cst_59 = arith.constant 9.99999974E-6 : f32
    %119 = vector.broadcast %cst_59 : f32 to vector<1x128xf32>
    %120 = arith.addf %116, %119 : vector<1x128xf32>
    %121 = math.rsqrt %120 : vector<1x128xf32>
    %122 = arith.mulf %118, %121 : vector<1x128xf32>
    %c3_60 = arith.constant 3 : index
    %c0_61 = arith.constant 0 : index
    %c0_62 = arith.constant 0 : index
    %123 = vector.load %arg5[%c3_60, %c0_61, %c0_62] : memref<9x1x128xf32, #tpu.memory_space<vmem>>, vector<1x1x128xf32>
    %124 = vector.shape_cast %123 : vector<1x1x128xf32> to vector<1x128xf32>
    %125 = arith.mulf %107, %122 : vector<1x128xf32>
    %126 = arith.subf %124, %125 : vector<1x128xf32>
    %127 = vector.broadcast %122 : vector<1x128xf32> to vector<8x128xf32>
    %128 = arith.mulf %103, %127 : vector<8x128xf32>
    %129 = vector.broadcast %126 : vector<1x128xf32> to vector<8x128xf32>
    %130 = arith.addf %128, %129 : vector<8x128xf32>
    %cst_63 = arith.constant 0.000000e+00 : f32
    %131 = vector.broadcast %cst_63 : f32 to vector<8x128xf32>
    %132 = arith.maximumf %130, %131 : vector<8x128xf32>
    %133 = arith.truncf %132 : vector<8x128xf32> to vector<8x128xbf16>
    %c3_64 = arith.constant 3 : index
    %c0_65 = arith.constant 0 : index
    %c0_66 = arith.constant 0 : index
    %134 = vector.load %arg3[%c3_64, %c0_65, %c0_66] : memref<8x128x128xbf16, #tpu.memory_space<vmem>>, vector<1x128x128xbf16>
    %135 = vector.shape_cast %134 : vector<1x128x128xbf16> to vector<128x128xbf16>
    %cst_67 = arith.constant dense<0.000000e+00> : vector<8x128xf32>
    %136 = tpu.matmul %133, %135, %cst_67 {dimension_numbers = #tpu.dot_dimension_numbers<[1], [0], [0], [1], [0, 0, 1, 1], [], []>} : vector<8x128xbf16>, vector<128x128xbf16>, vector<8x128xf32> -> vector<8x128xf32>
    %137 = arith.extf %100 : vector<8x128xbf16> to vector<8x128xf32>
    %cst_68 = arith.constant dense<0.000000e+00> : vector<128xf32>
    %138 = vector.multi_reduction <add>, %136, %cst_68 [0] : vector<8x128xf32> to vector<128xf32>
    %139 = vector.shape_cast %138 : vector<128xf32> to vector<1x128xf32>
    %cst_69 = arith.constant 1.250000e-01 : f32
    %140 = vector.broadcast %cst_69 : f32 to vector<1x128xf32>
    %141 = arith.mulf %139, %140 : vector<1x128xf32>
    %142 = arith.mulf %136, %136 : vector<8x128xf32>
    %cst_70 = arith.constant dense<0.000000e+00> : vector<128xf32>
    %143 = vector.multi_reduction <add>, %142, %cst_70 [0] : vector<8x128xf32> to vector<128xf32>
    %144 = vector.shape_cast %143 : vector<128xf32> to vector<1x128xf32>
    %cst_71 = arith.constant 1.250000e-01 : f32
    %145 = vector.broadcast %cst_71 : f32 to vector<1x128xf32>
    %146 = arith.mulf %144, %145 : vector<1x128xf32>
    %147 = arith.mulf %141, %141 : vector<1x128xf32>
    %148 = arith.subf %146, %147 : vector<1x128xf32>
    %cst_72 = arith.constant 0.000000e+00 : f32
    %149 = vector.broadcast %cst_72 : f32 to vector<1x128xf32>
    %150 = arith.maximumf %148, %149 : vector<1x128xf32>
    %c4 = arith.constant 4 : index
    %c0_73 = arith.constant 0 : index
    %c0_74 = arith.constant 0 : index
    %151 = vector.load %arg4[%c4, %c0_73, %c0_74] : memref<9x1x128xf32, #tpu.memory_space<vmem>>, vector<1x1x128xf32>
    %152 = vector.shape_cast %151 : vector<1x1x128xf32> to vector<1x128xf32>
    %cst_75 = arith.constant 9.99999974E-6 : f32
    %153 = vector.broadcast %cst_75 : f32 to vector<1x128xf32>
    %154 = arith.addf %150, %153 : vector<1x128xf32>
    %155 = math.rsqrt %154 : vector<1x128xf32>
    %156 = arith.mulf %152, %155 : vector<1x128xf32>
    %c4_76 = arith.constant 4 : index
    %c0_77 = arith.constant 0 : index
    %c0_78 = arith.constant 0 : index
    %157 = vector.load %arg5[%c4_76, %c0_77, %c0_78] : memref<9x1x128xf32, #tpu.memory_space<vmem>>, vector<1x1x128xf32>
    %158 = vector.shape_cast %157 : vector<1x1x128xf32> to vector<1x128xf32>
    %159 = arith.mulf %141, %156 : vector<1x128xf32>
    %160 = arith.subf %158, %159 : vector<1x128xf32>
    %161 = vector.broadcast %156 : vector<1x128xf32> to vector<8x128xf32>
    %162 = arith.mulf %136, %161 : vector<8x128xf32>
    %163 = vector.broadcast %160 : vector<1x128xf32> to vector<8x128xf32>
    %164 = arith.addf %162, %163 : vector<8x128xf32>
    %165 = arith.addf %164, %137 : vector<8x128xf32>
    %cst_79 = arith.constant 0.000000e+00 : f32
    %166 = vector.broadcast %cst_79 : f32 to vector<8x128xf32>
    %167 = arith.maximumf %165, %166 : vector<8x128xf32>
    %168 = arith.truncf %167 : vector<8x128xf32> to vector<8x128xbf16>
    %c4_80 = arith.constant 4 : index
    %c0_81 = arith.constant 0 : index
    %c0_82 = arith.constant 0 : index
    %169 = vector.load %arg3[%c4_80, %c0_81, %c0_82] : memref<8x128x128xbf16, #tpu.memory_space<vmem>>, vector<1x128x128xbf16>
    %170 = vector.shape_cast %169 : vector<1x128x128xbf16> to vector<128x128xbf16>
    %cst_83 = arith.constant dense<0.000000e+00> : vector<8x128xf32>
    %171 = tpu.matmul %168, %170, %cst_83 {dimension_numbers = #tpu.dot_dimension_numbers<[1], [0], [0], [1], [0, 0, 1, 1], [], []>} : vector<8x128xbf16>, vector<128x128xbf16>, vector<8x128xf32> -> vector<8x128xf32>
    %cst_84 = arith.constant dense<0.000000e+00> : vector<128xf32>
    %172 = vector.multi_reduction <add>, %171, %cst_84 [0] : vector<8x128xf32> to vector<128xf32>
    %173 = vector.shape_cast %172 : vector<128xf32> to vector<1x128xf32>
    %cst_85 = arith.constant 1.250000e-01 : f32
    %174 = vector.broadcast %cst_85 : f32 to vector<1x128xf32>
    %175 = arith.mulf %173, %174 : vector<1x128xf32>
    %176 = arith.mulf %171, %171 : vector<8x128xf32>
    %cst_86 = arith.constant dense<0.000000e+00> : vector<128xf32>
    %177 = vector.multi_reduction <add>, %176, %cst_86 [0] : vector<8x128xf32> to vector<128xf32>
    %178 = vector.shape_cast %177 : vector<128xf32> to vector<1x128xf32>
    %cst_87 = arith.constant 1.250000e-01 : f32
    %179 = vector.broadcast %cst_87 : f32 to vector<1x128xf32>
    %180 = arith.mulf %178, %179 : vector<1x128xf32>
    %181 = arith.mulf %175, %175 : vector<1x128xf32>
    %182 = arith.subf %180, %181 : vector<1x128xf32>
    %cst_88 = arith.constant 0.000000e+00 : f32
    %183 = vector.broadcast %cst_88 : f32 to vector<1x128xf32>
    %184 = arith.maximumf %182, %183 : vector<1x128xf32>
    %c5 = arith.constant 5 : index
    %c0_89 = arith.constant 0 : index
    %c0_90 = arith.constant 0 : index
    %185 = vector.load %arg4[%c5, %c0_89, %c0_90] : memref<9x1x128xf32, #tpu.memory_space<vmem>>, vector<1x1x128xf32>
    %186 = vector.shape_cast %185 : vector<1x1x128xf32> to vector<1x128xf32>
    %cst_91 = arith.constant 9.99999974E-6 : f32
    %187 = vector.broadcast %cst_91 : f32 to vector<1x128xf32>
    %188 = arith.addf %184, %187 : vector<1x128xf32>
    %189 = math.rsqrt %188 : vector<1x128xf32>
    %190 = arith.mulf %186, %189 : vector<1x128xf32>
    %c5_92 = arith.constant 5 : index
    %c0_93 = arith.constant 0 : index
    %c0_94 = arith.constant 0 : index
    %191 = vector.load %arg5[%c5_92, %c0_93, %c0_94] : memref<9x1x128xf32, #tpu.memory_space<vmem>>, vector<1x1x128xf32>
    %192 = vector.shape_cast %191 : vector<1x1x128xf32> to vector<1x128xf32>
    %193 = arith.mulf %175, %190 : vector<1x128xf32>
    %194 = arith.subf %192, %193 : vector<1x128xf32>
    %195 = vector.broadcast %190 : vector<1x128xf32> to vector<8x128xf32>
    %196 = arith.mulf %171, %195 : vector<8x128xf32>
    %197 = vector.broadcast %194 : vector<1x128xf32> to vector<8x128xf32>
    %198 = arith.addf %196, %197 : vector<8x128xf32>
    %cst_95 = arith.constant 0.000000e+00 : f32
    %199 = vector.broadcast %cst_95 : f32 to vector<8x128xf32>
    %200 = arith.maximumf %198, %199 : vector<8x128xf32>
    %201 = arith.truncf %200 : vector<8x128xf32> to vector<8x128xbf16>
    %c5_96 = arith.constant 5 : index
    %c0_97 = arith.constant 0 : index
    %c0_98 = arith.constant 0 : index
    %202 = vector.load %arg3[%c5_96, %c0_97, %c0_98] : memref<8x128x128xbf16, #tpu.memory_space<vmem>>, vector<1x128x128xbf16>
    %203 = vector.shape_cast %202 : vector<1x128x128xbf16> to vector<128x128xbf16>
    %cst_99 = arith.constant dense<0.000000e+00> : vector<8x128xf32>
    %204 = tpu.matmul %201, %203, %cst_99 {dimension_numbers = #tpu.dot_dimension_numbers<[1], [0], [0], [1], [0, 0, 1, 1], [], []>} : vector<8x128xbf16>, vector<128x128xbf16>, vector<8x128xf32> -> vector<8x128xf32>
    %205 = arith.extf %168 : vector<8x128xbf16> to vector<8x128xf32>
    %cst_100 = arith.constant dense<0.000000e+00> : vector<128xf32>
    %206 = vector.multi_reduction <add>, %204, %cst_100 [0] : vector<8x128xf32> to vector<128xf32>
    %207 = vector.shape_cast %206 : vector<128xf32> to vector<1x128xf32>
    %cst_101 = arith.constant 1.250000e-01 : f32
    %208 = vector.broadcast %cst_101 : f32 to vector<1x128xf32>
    %209 = arith.mulf %207, %208 : vector<1x128xf32>
    %210 = arith.mulf %204, %204 : vector<8x128xf32>
    %cst_102 = arith.constant dense<0.000000e+00> : vector<128xf32>
    %211 = vector.multi_reduction <add>, %210, %cst_102 [0] : vector<8x128xf32> to vector<128xf32>
    %212 = vector.shape_cast %211 : vector<128xf32> to vector<1x128xf32>
    %cst_103 = arith.constant 1.250000e-01 : f32
    %213 = vector.broadcast %cst_103 : f32 to vector<1x128xf32>
    %214 = arith.mulf %212, %213 : vector<1x128xf32>
    %215 = arith.mulf %209, %209 : vector<1x128xf32>
    %216 = arith.subf %214, %215 : vector<1x128xf32>
    %cst_104 = arith.constant 0.000000e+00 : f32
    %217 = vector.broadcast %cst_104 : f32 to vector<1x128xf32>
    %218 = arith.maximumf %216, %217 : vector<1x128xf32>
    %c6 = arith.constant 6 : index
    %c0_105 = arith.constant 0 : index
    %c0_106 = arith.constant 0 : index
    %219 = vector.load %arg4[%c6, %c0_105, %c0_106] : memref<9x1x128xf32, #tpu.memory_space<vmem>>, vector<1x1x128xf32>
    %220 = vector.shape_cast %219 : vector<1x1x128xf32> to vector<1x128xf32>
    %cst_107 = arith.constant 9.99999974E-6 : f32
    %221 = vector.broadcast %cst_107 : f32 to vector<1x128xf32>
    %222 = arith.addf %218, %221 : vector<1x128xf32>
    %223 = math.rsqrt %222 : vector<1x128xf32>
    %224 = arith.mulf %220, %223 : vector<1x128xf32>
    %c6_108 = arith.constant 6 : index
    %c0_109 = arith.constant 0 : index
    %c0_110 = arith.constant 0 : index
    %225 = vector.load %arg5[%c6_108, %c0_109, %c0_110] : memref<9x1x128xf32, #tpu.memory_space<vmem>>, vector<1x1x128xf32>
    %226 = vector.shape_cast %225 : vector<1x1x128xf32> to vector<1x128xf32>
    %227 = arith.mulf %209, %224 : vector<1x128xf32>
    %228 = arith.subf %226, %227 : vector<1x128xf32>
    %229 = vector.broadcast %224 : vector<1x128xf32> to vector<8x128xf32>
    %230 = arith.mulf %204, %229 : vector<8x128xf32>
    %231 = vector.broadcast %228 : vector<1x128xf32> to vector<8x128xf32>
    %232 = arith.addf %230, %231 : vector<8x128xf32>
    %233 = arith.addf %232, %205 : vector<8x128xf32>
    %cst_111 = arith.constant 0.000000e+00 : f32
    %234 = vector.broadcast %cst_111 : f32 to vector<8x128xf32>
    %235 = arith.maximumf %233, %234 : vector<8x128xf32>
    %236 = arith.truncf %235 : vector<8x128xf32> to vector<8x128xbf16>
    %c6_112 = arith.constant 6 : index
    %c0_113 = arith.constant 0 : index
    %c0_114 = arith.constant 0 : index
    %237 = vector.load %arg3[%c6_112, %c0_113, %c0_114] : memref<8x128x128xbf16, #tpu.memory_space<vmem>>, vector<1x128x128xbf16>
    %238 = vector.shape_cast %237 : vector<1x128x128xbf16> to vector<128x128xbf16>
    %cst_115 = arith.constant dense<0.000000e+00> : vector<8x128xf32>
    %239 = tpu.matmul %236, %238, %cst_115 {dimension_numbers = #tpu.dot_dimension_numbers<[1], [0], [0], [1], [0, 0, 1, 1], [], []>} : vector<8x128xbf16>, vector<128x128xbf16>, vector<8x128xf32> -> vector<8x128xf32>
    %cst_116 = arith.constant dense<0.000000e+00> : vector<128xf32>
    %240 = vector.multi_reduction <add>, %239, %cst_116 [0] : vector<8x128xf32> to vector<128xf32>
    %241 = vector.shape_cast %240 : vector<128xf32> to vector<1x128xf32>
    %cst_117 = arith.constant 1.250000e-01 : f32
    %242 = vector.broadcast %cst_117 : f32 to vector<1x128xf32>
    %243 = arith.mulf %241, %242 : vector<1x128xf32>
    %244 = arith.mulf %239, %239 : vector<8x128xf32>
    %cst_118 = arith.constant dense<0.000000e+00> : vector<128xf32>
    %245 = vector.multi_reduction <add>, %244, %cst_118 [0] : vector<8x128xf32> to vector<128xf32>
    %246 = vector.shape_cast %245 : vector<128xf32> to vector<1x128xf32>
    %cst_119 = arith.constant 1.250000e-01 : f32
    %247 = vector.broadcast %cst_119 : f32 to vector<1x128xf32>
    %248 = arith.mulf %246, %247 : vector<1x128xf32>
    %249 = arith.mulf %243, %243 : vector<1x128xf32>
    %250 = arith.subf %248, %249 : vector<1x128xf32>
    %cst_120 = arith.constant 0.000000e+00 : f32
    %251 = vector.broadcast %cst_120 : f32 to vector<1x128xf32>
    %252 = arith.maximumf %250, %251 : vector<1x128xf32>
    %c7 = arith.constant 7 : index
    %c0_121 = arith.constant 0 : index
    %c0_122 = arith.constant 0 : index
    %253 = vector.load %arg4[%c7, %c0_121, %c0_122] : memref<9x1x128xf32, #tpu.memory_space<vmem>>, vector<1x1x128xf32>
    %254 = vector.shape_cast %253 : vector<1x1x128xf32> to vector<1x128xf32>
    %cst_123 = arith.constant 9.99999974E-6 : f32
    %255 = vector.broadcast %cst_123 : f32 to vector<1x128xf32>
    %256 = arith.addf %252, %255 : vector<1x128xf32>
    %257 = math.rsqrt %256 : vector<1x128xf32>
    %258 = arith.mulf %254, %257 : vector<1x128xf32>
    %c7_124 = arith.constant 7 : index
    %c0_125 = arith.constant 0 : index
    %c0_126 = arith.constant 0 : index
    %259 = vector.load %arg5[%c7_124, %c0_125, %c0_126] : memref<9x1x128xf32, #tpu.memory_space<vmem>>, vector<1x1x128xf32>
    %260 = vector.shape_cast %259 : vector<1x1x128xf32> to vector<1x128xf32>
    %261 = arith.mulf %243, %258 : vector<1x128xf32>
    %262 = arith.subf %260, %261 : vector<1x128xf32>
    %263 = vector.broadcast %258 : vector<1x128xf32> to vector<8x128xf32>
    %264 = arith.mulf %239, %263 : vector<8x128xf32>
    %265 = vector.broadcast %262 : vector<1x128xf32> to vector<8x128xf32>
    %266 = arith.addf %264, %265 : vector<8x128xf32>
    %cst_127 = arith.constant 0.000000e+00 : f32
    %267 = vector.broadcast %cst_127 : f32 to vector<8x128xf32>
    %268 = arith.maximumf %266, %267 : vector<8x128xf32>
    %269 = arith.truncf %268 : vector<8x128xf32> to vector<8x128xbf16>
    %c7_128 = arith.constant 7 : index
    %c0_129 = arith.constant 0 : index
    %c0_130 = arith.constant 0 : index
    %270 = vector.load %arg3[%c7_128, %c0_129, %c0_130] : memref<8x128x128xbf16, #tpu.memory_space<vmem>>, vector<1x128x128xbf16>
    %271 = vector.shape_cast %270 : vector<1x128x128xbf16> to vector<128x128xbf16>
    %cst_131 = arith.constant dense<0.000000e+00> : vector<8x128xf32>
    %272 = tpu.matmul %269, %271, %cst_131 {dimension_numbers = #tpu.dot_dimension_numbers<[1], [0], [0], [1], [0, 0, 1, 1], [], []>} : vector<8x128xbf16>, vector<128x128xbf16>, vector<8x128xf32> -> vector<8x128xf32>
    %273 = arith.extf %236 : vector<8x128xbf16> to vector<8x128xf32>
    %cst_132 = arith.constant dense<0.000000e+00> : vector<128xf32>
    %274 = vector.multi_reduction <add>, %272, %cst_132 [0] : vector<8x128xf32> to vector<128xf32>
    %275 = vector.shape_cast %274 : vector<128xf32> to vector<1x128xf32>
    %cst_133 = arith.constant 1.250000e-01 : f32
    %276 = vector.broadcast %cst_133 : f32 to vector<1x128xf32>
    %277 = arith.mulf %275, %276 : vector<1x128xf32>
    %278 = arith.mulf %272, %272 : vector<8x128xf32>
    %cst_134 = arith.constant dense<0.000000e+00> : vector<128xf32>
    %279 = vector.multi_reduction <add>, %278, %cst_134 [0] : vector<8x128xf32> to vector<128xf32>
    %280 = vector.shape_cast %279 : vector<128xf32> to vector<1x128xf32>
    %cst_135 = arith.constant 1.250000e-01 : f32
    %281 = vector.broadcast %cst_135 : f32 to vector<1x128xf32>
    %282 = arith.mulf %280, %281 : vector<1x128xf32>
    %283 = arith.mulf %277, %277 : vector<1x128xf32>
    %284 = arith.subf %282, %283 : vector<1x128xf32>
    %cst_136 = arith.constant 0.000000e+00 : f32
    %285 = vector.broadcast %cst_136 : f32 to vector<1x128xf32>
    %286 = arith.maximumf %284, %285 : vector<1x128xf32>
    %c8 = arith.constant 8 : index
    %c0_137 = arith.constant 0 : index
    %c0_138 = arith.constant 0 : index
    %287 = vector.load %arg4[%c8, %c0_137, %c0_138] : memref<9x1x128xf32, #tpu.memory_space<vmem>>, vector<1x1x128xf32>
    %288 = vector.shape_cast %287 : vector<1x1x128xf32> to vector<1x128xf32>
    %cst_139 = arith.constant 9.99999974E-6 : f32
    %289 = vector.broadcast %cst_139 : f32 to vector<1x128xf32>
    %290 = arith.addf %286, %289 : vector<1x128xf32>
    %291 = math.rsqrt %290 : vector<1x128xf32>
    %292 = arith.mulf %288, %291 : vector<1x128xf32>
    %c8_140 = arith.constant 8 : index
    %c0_141 = arith.constant 0 : index
    %c0_142 = arith.constant 0 : index
    %293 = vector.load %arg5[%c8_140, %c0_141, %c0_142] : memref<9x1x128xf32, #tpu.memory_space<vmem>>, vector<1x1x128xf32>
    %294 = vector.shape_cast %293 : vector<1x1x128xf32> to vector<1x128xf32>
    %295 = arith.mulf %277, %292 : vector<1x128xf32>
    %296 = arith.subf %294, %295 : vector<1x128xf32>
    %297 = vector.broadcast %292 : vector<1x128xf32> to vector<8x128xf32>
    %298 = arith.mulf %272, %297 : vector<8x128xf32>
    %299 = vector.broadcast %296 : vector<1x128xf32> to vector<8x128xf32>
    %300 = arith.addf %298, %299 : vector<8x128xf32>
    %301 = arith.addf %300, %273 : vector<8x128xf32>
    %cst_143 = arith.constant 0.000000e+00 : f32
    %302 = vector.broadcast %cst_143 : f32 to vector<8x128xf32>
    %303 = arith.maximumf %301, %302 : vector<8x128xf32>
    %c0_144 = arith.constant 0 : index
    %c0_145 = arith.constant 0 : index
    %304 = vector.load %arg6[%c0_144, %c0_145] : memref<8x128xf32, #tpu.memory_space<vmem>>, vector<8x128xf32>
    tpu.vector_store %arg6[%c0_144, %c0_145], %303 {strides = array<i32>} : memref<8x128xf32, #tpu.memory_space<vmem>>, vector<8x128xf32>,
    return
  }
  func.func @transform_0(%arg0: i32) -> (i32, i32) {
    %c0_i32 = arith.constant 0 : i32
    %c0_i32_0 = arith.constant 0 : i32
    %c0_i32_1 = arith.constant 0 : i32
    return %c0_i32, %c0_i32_0 : i32, i32
  }
  func.func @transform_1(%arg0: i32) -> (i32, i32) {
    %c0_i32 = arith.constant 0 : i32
    %c0_i32_0 = arith.constant 0 : i32
    %c0_i32_1 = arith.constant 0 : i32
    return %c0_i32, %c0_i32_0 : i32, i32
  }
  func.func @transform_2(%arg0: i32) -> (i32, i32, i32) {
    %c0_i32 = arith.constant 0 : i32
    %c0_i32_0 = arith.constant 0 : i32
    %c0_i32_1 = arith.constant 0 : i32
    %c0_i32_2 = arith.constant 0 : i32
    return %c0_i32, %c0_i32_0, %c0_i32_1 : i32, i32, i32
  }
  func.func @transform_3(%arg0: i32) -> (i32, i32, i32) {
    %c0_i32 = arith.constant 0 : i32
    %c0_i32_0 = arith.constant 0 : i32
    %c0_i32_1 = arith.constant 0 : i32
    %c0_i32_2 = arith.constant 0 : i32
    return %c0_i32, %c0_i32_0, %c0_i32_1 : i32, i32, i32
  }
  func.func @transform_4(%arg0: i32) -> (i32, i32, i32) {
    %c0_i32 = arith.constant 0 : i32
    %c0_i32_0 = arith.constant 0 : i32
    %c0_i32_1 = arith.constant 0 : i32
    %c0_i32_2 = arith.constant 0 : i32
    return %c0_i32, %c0_i32_0, %c0_i32_1 : i32, i32, i32
  }
  func.func @transform_5(%arg0: i32) -> (i32, i32) {
    %c0_i32 = arith.constant 0 : i32
    %c0_i32_0 = arith.constant 0 : i32
    %c0_i32_1 = arith.constant 0 : i32
    return %c0_i32, %c0_i32_0 : i32, i32
  }
}

</mosaic_0001>

<llo_original>
// kernel: mlp_backbone.1
$region0: #{mlp_backbone.1}
  #allocation0 [shape = 'u32[]', space=smem, size = 0x4, offset = 0x4, fixed_abs, tag = 'smem constant byte address 0x4 - core index']
  #allocation1 [shape = 'u32[144,128]{1,0:T(1,128)}', space=vmem, size = 0x12000, scoped, tag = 'internal scratch']
  %s0 = inlined_call_operand.vmem [shape: bf16[8,128], index: 0, kind: input, shape index: {}]
  %s1 = inlined_call_operand.hbm [shape: bf16[128,128], index: 1, kind: input, shape index: {}]
  %s2 = inlined_call_operand.hbm [shape: bf16[8,128,128], index: 2, kind: input, shape index: {}]
  %s3 = inlined_call_operand.vmem [shape: f32[9,1,128], index: 3, kind: input, shape index: {}]
  %s4 = inlined_call_operand.vmem [shape: f32[9,1,128], index: 4, kind: input, shape index: {}]
  %s5 = inlined_call_operand.hbm [shape: f32[8,128], index: 5, kind: output, shape index: {}]
  %s6 = sld [smem:[#allocation0]]
  $region38: #{mlp_backbone.1} parent=0
    _
  %s8 = ssub.s32 1, %s6
  %s9 = scalar_select 0, %s8, %s6
  $region1: #{mlp_backbone.1} parent=0
    #allocation2 [shape = 'u8[32768]{0}', space=vmem, size = 0x8000, scoped, tag = 'input window, operand 1, single buffered']
    #allocation3 [shape = 's32[1]{0}', space=sflag, size = 0x4, scoped, tag = 'scoped memory for mlp_backbone.1']
    #allocation4 [shape = 's32[1]{0}', space=sflag, size = 0x4, scoped, tag = 'scoped memory for mlp_backbone.1']
    #allocation5 [shape = 'u8[262144]{0}', space=vmem, size = 0x40000, scoped, tag = 'input window, operand 2, single buffered']
    #allocation6 [shape = 's32[1]{0}', space=sflag, size = 0x4, scoped, tag = 'scoped memory for mlp_backbone.1']
    #allocation7 [shape = 'u8[4096]{0}', space=vmem, size = 0x1000, scoped, tag = 'output window, operand 0, single buffered']
    %10 = vsyncpa [#allocation3], 0
    %11 = vsyncpa [#allocation6], 0
    %12 = vsyncpa [#allocation4], 0
    // Predicated region
    $region2: #{mlp_backbone.1} parent=1 // pred_check
      _
    $region3: #{mlp_backbone.1} parent=1 // pred_check_branch
      %14 = sbr.rel (0) target = $region5
    $region4: #{mlp_backbone.1} parent=1 // pred_region
      _
    $region5: #{mlp_backbone.1} parent=1 // pred_fallthru
      _
    // Predicated region
    $region6: #{mlp_backbone.1} parent=1 // pred_check
      _
    $region7: #{mlp_backbone.1} parent=1 // pred_check_branch
      %16 = sbr.rel (0) target = $region9
    $region8: #{mlp_backbone.1} parent=1 // pred_region
      %s18 = ssub.s32 1024, 1024
      %19 = vsyncadd [#allocation3], %s18
      %s20 = sshll.u32 [#allocation2], 4
      %s21 = int_to_ptr.vmem [resolvable:$true] %s20
      %26 = dma.hbm_to_vmem [thread:$0]  %s1, 1024, %s21, [#allocation3], 64, 64, 4
    $region9: #{mlp_backbone.1} parent=1 // pred_fallthru
      _
    // Predicated region
    $region10: #{mlp_backbone.1} parent=1 // pred_check
      _
    $region11: #{mlp_backbone.1} parent=1 // pred_check_branch
      %28 = sbr.rel (0) target = $region13
    $region12: #{mlp_backbone.1} parent=1 // pred_region
      %s30 = ssub.s32 8192, 8192
      %31 = vsyncadd [#allocation6], %s30
      %s32 = sshll.u32 [#allocation5], 4
      %s33 = int_to_ptr.vmem [resolvable:$true] %s32
      %38 = dma.hbm_to_vmem [thread:$0]  %s2, 8192, %s33, [#allocation6], 64, 64, 4
    $region13: #{mlp_backbone.1} parent=1 // pred_fallthru
      _
    // Predicated region
    $region14: #{mlp_backbone.1} parent=1 // pred_check
      _
    $region15: #{mlp_backbone.1} parent=1 // pred_check_branch
      %40 = sbr.rel (0) target = $region17
    $region16: #{mlp_backbone.1} parent=1 // pred_region
      _
    $region17: #{mlp_backbone.1} parent=1 // pred_fallthru
      _
    // Predicated region
    $region18: #{mlp_backbone.1} parent=1 // pred_check
      _
    $region19: #{mlp_backbone.1} parent=1 // pred_check_branch
      %42 = sbr.rel (0) target = $region21
    $region20: #{mlp_backbone.1} parent=1 // pred_region
      _
    $region21: #{mlp_backbone.1} parent=1 // pred_fallthru
      _
    // Predicated region
    $region22: #{mlp_backbone.1} parent=1 // pred_check
      _
    $region23: #{mlp_backbone.1} parent=1 // pred_check_branch
      %44 = sbr.rel (0) target = $region25
    $region24: #{mlp_backbone.1} parent=1 // pred_region
      %45 = dma.done [#allocation3], 1024
    $region25: #{mlp_backbone.1} parent=1 // pred_fallthru
      _
    // Predicated region
    $region26: #{mlp_backbone.1} parent=1 // pred_check
      _
    $region27: #{mlp_backbone.1} parent=1 // pred_check_branch
      %47 = sbr.rel (0) target = $region29
    $region28: #{mlp_backbone.1} parent=1 // pred_region
      %48 = dma.done [#allocation6], 8192
    $region29: #{mlp_backbone.1} parent=1 // pred_fallthru
      _
    %v50 = vld [vmem:[%s0] sm:$0xf]
    %v51 = vld [vmem:[#allocation2] sm:$0xf]
    %v52 = vld [vmem:[#allocation2 + $0x4] sm:$0xf]
    %v53 = vld [vmem:[#allocation2 + $0x8] sm:$0xf]
    %v54 = vld [vmem:[#allocation2 + $0xc] sm:$0xf]
    %v55 = vld [vmem:[#allocation2 + $0x10] sm:$0xf]
    %v56 = vld [vmem:[#allocation2 + $0x14] sm:$0xf]
    %v57 = vld [vmem:[#allocation2 + $0x18] sm:$0xf]
    %v58 = vld [vmem:[#allocation2 + $0x1c] sm:$0xf]
    %v59 = vld [vmem:[#allocation2 + $0x20] sm:$0xf]
    %v60 = vld [vmem:[#allocation2 + $0x24] sm:$0xf]
    %v61 = vld [vmem:[#allocation2 + $0x28] sm:$0xf]
    %v62 = vld [vmem:[#allocation2 + $0x2c] sm:$0xf]
    %v63 = vld [vmem:[#allocation2 + $0x30] sm:$0xf]
    %v64 = vld [vmem:[#allocation2 + $0x34] sm:$0xf]
    %v65 = vld [vmem:[#allocation2 + $0x38] sm:$0xf]
    %v66 = vld [vmem:[#allocation2 + $0x3c] sm:$0xf]
    %v83 = vunpack.c.l.b16 %v51
    %v84 = vunpack.c.l.b16 %v52
    %v85 = vunpack.c.l.b16 %v53
    %v86 = vunpack.c.l.b16 %v54
    %v87 = vunpack.c.l.b16 %v55
    %v88 = vunpack.c.l.b16 %v56
    %v89 = vunpack.c.l.b16 %v57
    %v90 = vunpack.c.l.b16 %v58
    %v91 = vunpack.c.l.b16 %v59
    %v92 = vunpack.c.l.b16 %v60
    %v93 = vunpack.c.l.b16 %v61
    %v94 = vunpack.c.l.b16 %v62
    %v95 = vunpack.c.l.b16 %v63
    %v96 = vunpack.c.l.b16 %v64
    %v97 = vunpack.c.l.b16 %v65
    %v98 = vunpack.c.l.b16 %v66
    %v99 = vpack.c.b16 %v84, %v83
    %v100 = vpack.c.b16 %v86, %v85
    %v101 = vpack.c.b16 %v88, %v87
    %v102 = vpack.c.b16 %v90, %v89
    %v103 = vpack.c.b16 %v92, %v91
    %v104 = vpack.c.b16 %v94, %v93
    %v105 = vpack.c.b16 %v96, %v95
    %v106 = vpack.c.b16 %v98, %v97
    %115 = vmatprep.subr.bf16.mxu0 0
    %116 = vmatpush1.bf16.msra.mxu0 %v99
    %117 = vmatprep.subr.bf16.mxu0 0
    %118 = vmatpush1.bf16.msra.mxu0 %v100
    %119 = vmatprep.subr.bf16.mxu0 0
    %120 = vmatpush1.bf16.msra.mxu0 %v101
    %121 = vmatprep.subr.bf16.mxu0 0
    %122 = vmatpush1.bf16.msra.mxu0 %v102
    %123 = vmatprep.subr.bf16.mxu0 0
    %124 = vmatpush1.bf16.msra.mxu0 %v103
    %125 = vmatprep.subr.bf16.mxu0 0
    %126 = vmatpush1.bf16.msra.mxu0 %v104
    %127 = vmatprep.subr.bf16.mxu0 0
    %128 = vmatpush1.bf16.msra.mxu0 %v105
    %129 = vmatprep.subr.bf16.mxu0 0
    %130 = vmatpush1.bf16.msra.mxu0 %v106
    %131 = vmatprep.subr.bf16.mxu0 0
    %132 = vmatpush1.bf16.msra.mxu0 0
    %133 = vmatprep.subr.bf16.mxu0 0
    %134 = vmatpush1.bf16.msra.mxu0 0
    %135 = vmatprep.subr.bf16.mxu0 0
    %136 = vmatpush1.bf16.msra.mxu0 0
    %137 = vmatprep.subr.bf16.mxu0 0
    %138 = vmatpush1.bf16.msra.mxu0 0
    %139 = vmatprep.subr.bf16.mxu0 0
    %140 = vmatpush1.bf16.msra.mxu0 0
    %141 = vmatprep.subr.bf16.mxu0 0
    %142 = vmatpush1.bf16.msra.mxu0 0
    %143 = vmatprep.subr.bf16.mxu0 0
    %144 = vmatpush1.bf16.msra.mxu0 0
    %145 = vmatprep.subr.bf16.mxu0 0
    %146 = vmatpush1.bf16.msra.mxu0 0
    %147 = vmatprep.mubr.bf16.mxu0 0
    %148 = vmatmul.mubr.bf16.gmra.mrb[0].mxu0 %v50
    %v149 = vpop.f32.mrb[0].mxu0
    %v150 = vadd.f32 0.0, %v149
    %v151 = vpop.f32.mrb[0].mxu0
    %v152 = vpop.f32.mrb[0].mxu0
    %v153 = vpop.f32.mrb[0].mxu0
    %154 = vdwg.mxu0
    %v155 = vrot.slane %v150, 4
    %v156 = vadd.f32 %v150, %v155
    %v157 = vrot.slane %v156, 2
    %v158 = vadd.f32 %v156, %v157
    %v159 = vrot.slane %v158, 1
    %v160 = vadd.f32 %v158, %v159
    %v161 = vmul.f32 %v160, 0.125
    %v162 = vmul.f32 %v150, %v150
    %v163 = vrot.slane %v162, 4
    %v164 = vadd.f32 %v162, %v163
    %v165 = vrot.slane %v164, 2
    %v166 = vadd.f32 %v164, %v165
    %v167 = vrot.slane %v166, 1
    %v168 = vadd.f32 %v166, %v167
    %v169 = vmul.f32 %v168, 0.125
    %v170 = vmul.f32 %v161, %v161
    %v171 = vsub.f32 %v169, %v170
    %v172 = vmax.f32 %v171, 0.0
    %v173 = vld [vmem:[%s3] sm:$0x1]
    %v174 = vadd.f32 %v172, 1e-05
    %v175 = vrsqrt.pop %v174
    %v176 = vmul.f32 %v173, %v175
    %v177 = vld [vmem:[%s4] sm:$0x1]
    %v178 = vmul.f32 %v161, %v176
    %v179 = vsub.f32 %v177, %v178
    %v181 = vlaneseq
    %v182 = vshrl.u32 %v181, 7
    %v183 = vsub.s32 0, %v182
    %v184 = vrot.slane %v176, %v183
    %v186 = vmul.f32 %v150, %v184
    %v188 = vlaneseq
    %v189 = vshrl.u32 %v188, 7
    %v190 = vsub.s32 0, %v189
    %v191 = vrot.slane %v179, %v190
    %v193 = vadd.f32 %v186, %v191
    %v194 = vmax.f32 %v193, 0.0
    %v195 = vpack.c.bf16 %v194, %v194
    %v196 = vld [vmem:[#allocation5] sm:$0xf]
    %v197 = vld [vmem:[#allocation5 + $0x4] sm:$0xf]
    %v198 = vld [vmem:[#allocation5 + $0x8] sm:$0xf]
    %v199 = vld [vmem:[#allocation5 + $0xc] sm:$0xf]
    %v200 = vld [vmem:[#allocation5 + $0x10] sm:$0xf]
    %v201 = vld [vmem:[#allocation5 + $0x14] sm:$0xf]
    %v202 = vld [vmem:[#allocation5 + $0x18] sm:$0xf]
    %v203 = vld [vmem:[#allocation5 + $0x1c] sm:$0xf]
    %v204 = vld [vmem:[#allocation5 + $0x20] sm:$0xf]
    %v205 = vld [vmem:[#allocation5 + $0x24] sm:$0xf]
    %v206 = vld [vmem:[#allocation5 + $0x28] sm:$0xf]
    %v207 = vld [vmem:[#allocation5 + $0x2c] sm:$0xf]
    %v208 = vld [vmem:[#allocation5 + $0x30] sm:$0xf]
    %v209 = vld [vmem:[#allocation5 + $0x34] sm:$0xf]
    %v210 = vld [vmem:[#allocation5 + $0x38] sm:$0xf]
    %v211 = vld [vmem:[#allocation5 + $0x3c] sm:$0xf]
    %v228 = vunpack.c.l.b16 %v196
    %v229 = vunpack.c.l.b16 %v197
    %v230 = vunpack.c.l.b16 %v198
    %v231 = vunpack.c.l.b16 %v199
    %v232 = vunpack.c.l.b16 %v200
    %v233 = vunpack.c.l.b16 %v201
    %v234 = vunpack.c.l.b16 %v202
    %v235 = vunpack.c.l.b16 %v203
    %v236 = vunpack.c.l.b16 %v204
    %v237 = vunpack.c.l.b16 %v205
    %v238 = vunpack.c.l.b16 %v206
    %v239 = vunpack.c.l.b16 %v207
    %v240 = vunpack.c.l.b16 %v208
    %v241 = vunpack.c.l.b16 %v209
    %v242 = vunpack.c.l.b16 %v210
    %v243 = vunpack.c.l.b16 %v211
    %v244 = vpack.c.b16 %v229, %v228
    %v245 = vpack.c.b16 %v231, %v230
    %v246 = vpack.c.b16 %v233, %v232
    %v247 = vpack.c.b16 %v235, %v234
    %v248 = vpack.c.b16 %v237, %v236
    %v249 = vpack.c.b16 %v239, %v238
    %v250 = vpack.c.b16 %v241, %v240
    %v251 = vpack.c.b16 %v243, %v242
    %260 = vmatprep.subr.bf16.mxu0 0
    %261 = vmatpush1.bf16.msra.mxu0 %v244
    %262 = vmatprep.subr.bf16.mxu0 0
    %263 = vmatpush1.bf16.msra.mxu0 %v245
    %264 = vmatprep.subr.bf16.mxu0 0
    %265 = vmatpush1.bf16.msra.mxu0 %v246
    %266 = vmatprep.subr.bf16.mxu0 0
    %267 = vmatpush1.bf16.msra.mxu0 %v247
    %268 = vmatprep.subr.bf16.mxu0 0
    %269 = vmatpush1.bf16.msra.mxu0 %v248
    %270 = vmatprep.subr.bf16.mxu0 0
    %271 = vmatpush1.bf16.msra.mxu0 %v249
    %272 = vmatprep.subr.bf16.mxu0 0
    %273 = vmatpush1.bf16.msra.mxu0 %v250
    %274 = vmatprep.subr.bf16.mxu0 0
    %275 = vmatpush1.bf16.msra.mxu0 %v251
    %276 = vmatprep.subr.bf16.mxu0 0
    %277 = vmatpush1.bf16.msra.mxu0 0
    %278 = vmatprep.subr.bf16.mxu0 0
    %279 = vmatpush1.bf16.msra.mxu0 0
    %280 = vmatprep.subr.bf16.mxu0 0
    %281 = vmatpush1.bf16.msra.mxu0 0
    %282 = vmatprep.subr.bf16.mxu0 0
    %283 = vmatpush1.bf16.msra.mxu0 0
    %284 = vmatprep.subr.bf16.mxu0 0
    %285 = vmatpush1.bf16.msra.mxu0 0
    %286 = vmatprep.subr.bf16.mxu0 0
    %287 = vmatpush1.bf16.msra.mxu0 0
    %288 = vmatprep.subr.bf16.mxu0 0
    %289 = vmatpush1.bf16.msra.mxu0 0
    %290 = vmatprep.subr.bf16.mxu0 0
    %291 = vmatpush1.bf16.msra.mxu0 0
    %292 = vmatprep.mubr.bf16.mxu0 0
    %293 = vmatmul.mubr.bf16.gmra.mrb[0].mxu0 %v195
    %v294 = vpop.f32.mrb[0].mxu0
    %v295 = vadd.f32 0.0, %v294
    %v296 = vpop.f32.mrb[0].mxu0
    %v297 = vpop.f32.mrb[0].mxu0
    %v298 = vpop.f32.mrb[0].mxu0
    %299 = vdwg.mxu0
    %v300 = vrot.slane %v295, 4
    %v301 = vadd.f32 %v295, %v300
    %v302 = vrot.slane %v301, 2
    %v303 = vadd.f32 %v301, %v302
    %v304 = vrot.slane %v303, 1
    %v305 = vadd.f32 %v303, %v304
    %v306 = vmul.f32 %v305, 0.125
    %v307 = vmul.f32 %v295, %v295
    %v308 = vrot.slane %v307, 4
    %v309 = vadd.f32 %v307, %v308
    %v310 = vrot.slane %v309, 2
    %v311 = vadd.f32 %v309, %v310
    %v312 = vrot.slane %v311, 1
    %v313 = vadd.f32 %v311, %v312
    %v314 = vmul.f32 %v313, 0.125
    %v315 = vmul.f32 %v306, %v306
    %v316 = vsub.f32 %v314, %v315
    %v317 = vmax.f32 %v316, 0.0
    %s318 = scalar_lea.vmem %s3, 1
    %v319 = vld [vmem:[%s318] sm:$0x1]
    %v320 = vadd.f32 %v317, 1e-05
    %v321 = vrsqrt.pop %v320
    %v322 = vmul.f32 %v319, %v321
    %s323 = scalar_lea.vmem %s4, 1
    %v324 = vld [vmem:[%s323] sm:$0x1]
    %v325 = vmul.f32 %v306, %v322
    %v326 = vsub.f32 %v324, %v325
    %v328 = vlaneseq
    %v329 = vshrl.u32 %v328, 7
    %v330 = vsub.s32 0, %v329
    %v331 = vrot.slane %v322, %v330
    %v333 = vmul.f32 %v295, %v331
    %v335 = vlaneseq
    %v336 = vshrl.u32 %v335, 7
    %v337 = vsub.s32 0, %v336
    %v338 = vrot.slane %v326, %v337
    %v340 = vadd.f32 %v333, %v338
    %v341 = vmax.f32 %v340, 0.0
    %v342 = vpack.c.bf16 %v341, %v341
    %s343 = scalar_lea.vmem [#allocation5], 64
    %v344 = vld [vmem:[%s343] sm:$0xf]
    %v345 = vld [vmem:[%s343 + $0x4] sm:$0xf]
    %v346 = vld [vmem:[%s343 + $0x8] sm:$0xf]
    %v347 = vld [vmem:[%s343 + $0xc] sm:$0xf]
    %v348 = vld [vmem:[%s343 + $0x10] sm:$0xf]
    %v349 = vld [vmem:[%s343 + $0x14] sm:$0xf]
    %v350 = vld [vmem:[%s343 + $0x18] sm:$0xf]
    %v351 = vld [vmem:[%s343 + $0x1c] sm:$0xf]
    %v352 = vld [vmem:[%s343 + $0x20] sm:$0xf]
    %v353 = vld [vmem:[%s343 + $0x24] sm:$0xf]
    %v354 = vld [vmem:[%s343 + $0x28] sm:$0xf]
    %v355 = vld [vmem:[%s343 + $0x2c] sm:$0xf]
    %v356 = vld [vmem:[%s343 + $0x30] sm:$0xf]
    %v357 = vld [vmem:[%s343 + $0x34] sm:$0xf]
    %v358 = vld [vmem:[%s343 + $0x38] sm:$0xf]
    %v359 = vld [vmem:[%s343 + $0x3c] sm:$0xf]
    %v376 = vunpack.c.l.b16 %v344
    %v377 = vunpack.c.l.b16 %v345
    %v378 = vunpack.c.l.b16 %v346
    %v379 = vunpack.c.l.b16 %v347
    %v380 = vunpack.c.l.b16 %v348
    %v381 = vunpack.c.l.b16 %v349
    %v382 = vunpack.c.l.b16 %v350
    %v383 = vunpack.c.l.b16 %v351
    %v384 = vunpack.c.l.b16 %v352
    %v385 = vunpack.c.l.b16 %v353
    %v386 = vunpack.c.l.b16 %v354
    %v387 = vunpack.c.l.b16 %v355
    %v388 = vunpack.c.l.b16 %v356
    %v389 = vunpack.c.l.b16 %v357
    %v390 = vunpack.c.l.b16 %v358
    %v391 = vunpack.c.l.b16 %v359
    %v392 = vpack.c.b16 %v377, %v376
    %v393 = vpack.c.b16 %v379, %v378
    %v394 = vpack.c.b16 %v381, %v380
    %v395 = vpack.c.b16 %v383, %v382
    %v396 = vpack.c.b16 %v385, %v384
    %v397 = vpack.c.b16 %v387, %v386
    %v398 = vpack.c.b16 %v389, %v388
    %v399 = vpack.c.b16 %v391, %v390
    %408 = vmatprep.subr.bf16.mxu0 0
    %409 = vmatpush1.bf16.msra.mxu0 %v392
    %410 = vmatprep.subr.bf16.mxu0 0
    %411 = vmatpush1.bf16.msra.mxu0 %v393
    %412 = vmatprep.subr.bf16.mxu0 0
    %413 = vmatpush1.bf16.msra.mxu0 %v394
    %414 = vmatprep.subr.bf16.mxu0 0
    %415 = vmatpush1.bf16.msra.mxu0 %v395
    %416 = vmatprep.subr.bf16.mxu0 0
    %417 = vmatpush1.bf16.msra.mxu0 %v396
    %418 = vmatprep.subr.bf16.mxu0 0
    %419 = vmatpush1.bf16.msra.mxu0 %v397
    %420 = vmatprep.subr.bf16.mxu0 0
    %421 = vmatpush1.bf16.msra.mxu0 %v398
    %422 = vmatprep.subr.bf16.mxu0 0
    %423 = vmatpush1.bf16.msra.mxu0 %v399
    %424 = vmatprep.subr.bf16.mxu0 0
    %425 = vmatpush1.bf16.msra.mxu0 0
    %426 = vmatprep.subr.bf16.mxu0 0
    %427 = vmatpush1.bf16.msra.mxu0 0
    %428 = vmatprep.subr.bf16.mxu0 0
    %429 = vmatpush1.bf16.msra.mxu0 0
    %430 = vmatprep.subr.bf16.mxu0 0
    %431 = vmatpush1.bf16.msra.mxu0 0
    %432 = vmatprep.subr.bf16.mxu0 0
    %433 = vmatpush1.bf16.msra.mxu0 0
    %434 = vmatprep.subr.bf16.mxu0 0
    %435 = vmatpush1.bf16.msra.mxu0 0
    %436 = vmatprep.subr.bf16.mxu0 0
    %437 = vmatpush1.bf16.msra.mxu0 0
    %438 = vmatprep.subr.bf16.mxu0 0
    %439 = vmatpush1.bf16.msra.mxu0 0
    %440 = vmatprep.mubr.bf16.mxu0 0
    %441 = vmatmul.mubr.bf16.gmra.mrb[0].mxu0 %v342
    %v442 = vpop.f32.mrb[0].mxu0
    %v443 = vadd.f32 0.0, %v442
    %v444 = vpop.f32.mrb[0].mxu0
    %v445 = vpop.f32.mrb[0].mxu0
    %v446 = vpop.f32.mrb[0].mxu0
    %447 = vdwg.mxu0
    %v448 = vunpack.c.l.bf16 %v195
    %v449 = vrot.slane %v443, 4
    %v450 = vadd.f32 %v443, %v449
    %v451 = vrot.slane %v450, 2
    %v452 = vadd.f32 %v450, %v451
    %v453 = vrot.slane %v452, 1
    %v454 = vadd.f32 %v452, %v453
    %v455 = vmul.f32 %v454, 0.125
    %v456 = vmul.f32 %v443, %v443
    %v457 = vrot.slane %v456, 4
    %v458 = vadd.f32 %v456, %v457
    %v459 = vrot.slane %v458, 2
    %v460 = vadd.f32 %v458, %v459
    %v461 = vrot.slane %v460, 1
    %v462 = vadd.f32 %v460, %v461
    %v463 = vmul.f32 %v462, 0.125
    %v464 = vmul.f32 %v455, %v455
    %v465 = vsub.f32 %v463, %v464
    %v466 = vmax.f32 %v465, 0.0
    %s467 = scalar_lea.vmem %s3, 2
    %v468 = vld [vmem:[%s467] sm:$0x1]
    %v469 = vadd.f32 %v466, 1e-05
    %v470 = vrsqrt.pop %v469
    %v471 = vmul.f32 %v468, %v470
    %s472 = scalar_lea.vmem %s4, 2
    %v473 = vld [vmem:[%s472] sm:$0x1]
    %v474 = vmul.f32 %v455, %v471
    %v475 = vsub.f32 %v473, %v474
    %v477 = vlaneseq
    %v478 = vshrl.u32 %v477, 7
    %v479 = vsub.s32 0, %v478
    %v480 = vrot.slane %v471, %v479
    %v482 = vmul.f32 %v443, %v480
    %v484 = vlaneseq
    %v485 = vshrl.u32 %v484, 7
    %v486 = vsub.s32 0, %v485
    %v487 = vrot.slane %v475, %v486
    %v489 = vadd.f32 %v482, %v487
    %v490 = vadd.f32 %v489, %v448
    %v491 = vmax.f32 %v490, 0.0
    %v492 = vpack.c.bf16 %v491, %v491
    %s493 = scalar_lea.vmem [#allocation5], 128
    %v494 = vld [vmem:[%s493] sm:$0xf]
    %v495 = vld [vmem:[%s493 + $0x4] sm:$0xf]
    %v496 = vld [vmem:[%s493 + $0x8] sm:$0xf]
    %v497 = vld [vmem:[%s493 + $0xc] sm:$0xf]
    %v498 = vld [vmem:[%s493 + $0x10] sm:$0xf]
    %v499 = vld [vmem:[%s493 + $0x14] sm:$0xf]
    %v500 = vld [vmem:[%s493 + $0x18] sm:$0xf]
    %v501 = vld [vmem:[%s493 + $0x1c] sm:$0xf]
    %v502 = vld [vmem:[%s493 + $0x20] sm:$0xf]
    %v503 = vld [vmem:[%s493 + $0x24] sm:$0xf]
    %v504 = vld [vmem:[%s493 + $0x28] sm:$0xf]
    %v505 = vld [vmem:[%s493 + $0x2c] sm:$0xf]
    %v506 = vld [vmem:[%s493 + $0x30] sm:$0xf]
    %v507 = vld [vmem:[%s493 + $0x34] sm:$0xf]
    %v508 = vld [vmem:[%s493 + $0x38] sm:$0xf]
    %v509 = vld [vmem:[%s493 + $0x3c] sm:$0xf]
    %v526 = vunpack.c.l.b16 %v494
    %v527 = vunpack.c.l.b16 %v495
    %v528 = vunpack.c.l.b16 %v496
    %v529 = vunpack.c.l.b16 %v497
    %v530 = vunpack.c.l.b16 %v498
    %v531 = vunpack.c.l.b16 %v499
    %v532 = vunpack.c.l.b16 %v500
    %v533 = vunpack.c.l.b16 %v501
    %v534 = vunpack.c.l.b16 %v502
    %v535 = vunpack.c.l.b16 %v503
    %v536 = vunpack.c.l.b16 %v504
    %v537 = vunpack.c.l.b16 %v505
    %v538 = vunpack.c.l.b16 %v506
    %v539 = vunpack.c.l.b16 %v507
    %v540 = vunpack.c.l.b16 %v508
    %v541 = vunpack.c.l.b16 %v509
    %v542 = vpack.c.b16 %v527, %v526
    %v543 = vpack.c.b16 %v529, %v528
    %v544 = vpack.c.b16 %v531, %v530
    %v545 = vpack.c.b16 %v533, %v532
    %v546 = vpack.c.b16 %v535, %v534
    %v547 = vpack.c.b16 %v537, %v536
    %v548 = vpack.c.b16 %v539, %v538
    %v549 = vpack.c.b16 %v541, %v540
    %558 = vmatprep.subr.bf16.mxu0 0
    %559 = vmatpush1.bf16.msra.mxu0 %v542
    %560 = vmatprep.subr.bf16.mxu0 0
    %561 = vmatpush1.bf16.msra.mxu0 %v543
    %562 = vmatprep.subr.bf16.mxu0 0
    %563 = vmatpush1.bf16.msra.mxu0 %v544
    %564 = vmatprep.subr.bf16.mxu0 0
    %565 = vmatpush1.bf16.msra.mxu0 %v545
    %566 = vmatprep.subr.bf16.mxu0 0
    %567 = vmatpush1.bf16.msra.mxu0 %v546
    %568 = vmatprep.subr.bf16.mxu0 0
    %569 = vmatpush1.bf16.msra.mxu0 %v547
    %570 = vmatprep.subr.bf16.mxu0 0
    %571 = vmatpush1.bf16.msra.mxu0 %v548
    %572 = vmatprep.subr.bf16.mxu0 0
    %573 = vmatpush1.bf16.msra.mxu0 %v549
    %574 = vmatprep.subr.bf16.mxu0 0
    %575 = vmatpush1.bf16.msra.mxu0 0
    %576 = vmatprep.subr.bf16.mxu0 0
    %577 = vmatpush1.bf16.msra.mxu0 0
    %578 = vmatprep.subr.bf16.mxu0 0
    %579 = vmatpush1.bf16.msra.mxu0 0
    %580 = vmatprep.subr.bf16.mxu0 0
    %581 = vmatpush1.bf16.msra.mxu0 0
    %582 = vmatprep.subr.bf16.mxu0 0
    %583 = vmatpush1.bf16.msra.mxu0 0
    %584 = vmatprep.subr.bf16.mxu0 0
    %585 = vmatpush1.bf16.msra.mxu0 0
    %586 = vmatprep.subr.bf16.mxu0 0
    %587 = vmatpush1.bf16.msra.mxu0 0
    %588 = vmatprep.subr.bf16.mxu0 0
    %589 = vmatpush1.bf16.msra.mxu0 0
    %590 = vmatprep.mubr.bf16.mxu0 0
    %591 = vmatmul.mubr.bf16.gmra.mrb[0].mxu0 %v492
    %v592 = vpop.f32.mrb[0].mxu0
    %v593 = vadd.f32 0.0, %v592
    %v594 = vpop.f32.mrb[0].mxu0
    %v595 = vpop.f32.mrb[0].mxu0
    %v596 = vpop.f32.mrb[0].mxu0
    %597 = vdwg.mxu0
    %v598 = vrot.slane %v593, 4
    %v599 = vadd.f32 %v593, %v598
    %v600 = vrot.slane %v599, 2
    %v601 = vadd.f32 %v599, %v600
    %v602 = vrot.slane %v601, 1
    %v603 = vadd.f32 %v601, %v602
    %v604 = vmul.f32 %v603, 0.125
    %v605 = vmul.f32 %v593, %v593
    %v606 = vrot.slane %v605, 4
    %v607 = vadd.f32 %v605, %v606
    %v608 = vrot.slane %v607, 2
    %v609 = vadd.f32 %v607, %v608
    %v610 = vrot.slane %v609, 1
    %v611 = vadd.f32 %v609, %v610
    %v612 = vmul.f32 %v611, 0.125
    %v613 = vmul.f32 %v604, %v604
    %v614 = vsub.f32 %v612, %v613
    %v615 = vmax.f32 %v614, 0.0
    %s616 = scalar_lea.vmem %s3, 3
    %v617 = vld [vmem:[%s616] sm:$0x1]
    %v618 = vadd.f32 %v615, 1e-05
    %v619 = vrsqrt.pop %v618
    %v620 = vmul.f32 %v617, %v619
    %s621 = scalar_lea.vmem %s4, 3
    %v622 = vld [vmem:[%s621] sm:$0x1]
    %v623 = vmul.f32 %v604, %v620
    %v624 = vsub.f32 %v622, %v623
    %v626 = vlaneseq
    %v627 = vshrl.u32 %v626, 7
    %v628 = vsub.s32 0, %v627
    %v629 = vrot.slane %v620, %v628
    %v631 = vmul.f32 %v593, %v629
    %v633 = vlaneseq
    %v634 = vshrl.u32 %v633, 7
    %v635 = vsub.s32 0, %v634
    %v636 = vrot.slane %v624, %v635
    %v638 = vadd.f32 %v631, %v636
    %v639 = vmax.f32 %v638, 0.0
    %v640 = vpack.c.bf16 %v639, %v639
    %s641 = scalar_lea.vmem [#allocation5], 192
    %v642 = vld [vmem:[%s641] sm:$0xf]
    %v643 = vld [vmem:[%s641 + $0x4] sm:$0xf]
    %v644 = vld [vmem:[%s641 + $0x8] sm:$0xf]
    %v645 = vld [vmem:[%s641 + $0xc] sm:$0xf]
    %v646 = vld [vmem:[%s641 + $0x10] sm:$0xf]
    %v647 = vld [vmem:[%s641 + $0x14] sm:$0xf]
    %v648 = vld [vmem:[%s641 + $0x18] sm:$0xf]
    %v649 = vld [vmem:[%s641 + $0x1c] sm:$0xf]
    %v650 = vld [vmem:[%s641 + $0x20] sm:$0xf]
    %v651 = vld [vmem:[%s641 + $0x24] sm:$0xf]
    %v652 = vld [vmem:[%s641 + $0x28] sm:$0xf]
    %v653 = vld [vmem:[%s641 + $0x2c] sm:$0xf]
    %v654 = vld [vmem:[%s641 + $0x30] sm:$0xf]
    %v655 = vld [vmem:[%s641 + $0x34] sm:$0xf]
    %v656 = vld [vmem:[%s641 + $0x38] sm:$0xf]
    %v657 = vld [vmem:[%s641 + $0x3c] sm:$0xf]
    %v674 = vunpack.c.l.b16 %v642
    %v675 = vunpack.c.l.b16 %v643
    %v676 = vunpack.c.l.b16 %v644
    %v677 = vunpack.c.l.b16 %v645
    %v678 = vunpack.c.l.b16 %v646
    %v679 = vunpack.c.l.b16 %v647
    %v680 = vunpack.c.l.b16 %v648
    %v681 = vunpack.c.l.b16 %v649
    %v682 = vunpack.c.l.b16 %v650
    %v683 = vunpack.c.l.b16 %v651
    %v684 = vunpack.c.l.b16 %v652
    %v685 = vunpack.c.l.b16 %v653
    %v686 = vunpack.c.l.b16 %v654
    %v687 = vunpack.c.l.b16 %v655
    %v688 = vunpack.c.l.b16 %v656
    %v689 = vunpack.c.l.b16 %v657
    %v690 = vpack.c.b16 %v675, %v674
    %v691 = vpack.c.b16 %v677, %v676
    %v692 = vpack.c.b16 %v679, %v678
    %v693 = vpack.c.b16 %v681, %v680
    %v694 = vpack.c.b16 %v683, %v682
    %v695 = vpack.c.b16 %v685, %v684
    %v696 = vpack.c.b16 %v687, %v686
    %v697 = vpack.c.b16 %v689, %v688
    %706 = vmatprep.subr.bf16.mxu0 0
    %707 = vmatpush1.bf16.msra.mxu0 %v690
    %708 = vmatprep.subr.bf16.mxu0 0
    %709 = vmatpush1.bf16.msra.mxu0 %v691
    %710 = vmatprep.subr.bf16.mxu0 0
    %711 = vmatpush1.bf16.msra.mxu0 %v692
    %712 = vmatprep.subr.bf16.mxu0 0
    %713 = vmatpush1.bf16.msra.mxu0 %v693
    %714 = vmatprep.subr.bf16.mxu0 0
    %715 = vmatpush1.bf16.msra.mxu0 %v694
    %716 = vmatprep.subr.bf16.mxu0 0
    %717 = vmatpush1.bf16.msra.mxu0 %v695
    %718 = vmatprep.subr.bf16.mxu0 0
    %719 = vmatpush1.bf16.msra.mxu0 %v696
    %720 = vmatprep.subr.bf16.mxu0 0
    %721 = vmatpush1.bf16.msra.mxu0 %v697
    %722 = vmatprep.subr.bf16.mxu0 0
    %723 = vmatpush1.bf16.msra.mxu0 0
    %724 = vmatprep.subr.bf16.mxu0 0
    %725 = vmatpush1.bf16.msra.mxu0 0
    %726 = vmatprep.subr.bf16.mxu0 0
    %727 = vmatpush1.bf16.msra.mxu0 0
    %728 = vmatprep.subr.bf16.mxu0 0
    %729 = vmatpush1.bf16.msra.mxu0 0
    %730 = vmatprep.subr.bf16.mxu0 0
    %731 = vmatpush1.bf16.msra.mxu0 0
    %732 = vmatprep.subr.bf16.mxu0 0
    %733 = vmatpush1.bf16.msra.mxu0 0
    %734 = vmatprep.subr.bf16.mxu0 0
    %735 = vmatpush1.bf16.msra.mxu0 0
    %736 = vmatprep.subr.bf16.mxu0 0
    %737 = vmatpush1.bf16.msra.mxu0 0
    %738 = vmatprep.mubr.bf16.mxu0 0
    %739 = vmatmul.mubr.bf16.gmra.mrb[0].mxu0 %v640
    %v740 = vpop.f32.mrb[0].mxu0
    %v741 = vadd.f32 0.0, %v740
    %v742 = vpop.f32.mrb[0].mxu0
    %v743 = vpop.f32.mrb[0].mxu0
    %v744 = vpop.f32.mrb[0].mxu0
    %745 = vdwg.mxu0
    %v746 = vunpack.c.l.bf16 %v492
    %v747 = vrot.slane %v741, 4
    %v748 = vadd.f32 %v741, %v747
    %v749 = vrot.slane %v748, 2
    %v750 = vadd.f32 %v748, %v749
    %v751 = vrot.slane %v750, 1
    %v752 = vadd.f32 %v750, %v751
    %v753 = vmul.f32 %v752, 0.125
    %v754 = vmul.f32 %v741, %v741
    %v755 = vrot.slane %v754, 4
    %v756 = vadd.f32 %v754, %v755
    %v757 = vrot.slane %v756, 2
    %v758 = vadd.f32 %v756, %v757
    %v759 = vrot.slane %v758, 1
    %v760 = vadd.f32 %v758, %v759
    %v761 = vmul.f32 %v760, 0.125
    %v762 = vmul.f32 %v753, %v753
    %v763 = vsub.f32 %v761, %v762
    %v764 = vmax.f32 %v763, 0.0
    %s765 = scalar_lea.vmem %s3, 4
    %v766 = vld [vmem:[%s765] sm:$0x1]
    %v767 = vadd.f32 %v764, 1e-05
    %v768 = vrsqrt.pop %v767
    %v769 = vmul.f32 %v766, %v768
    %s770 = scalar_lea.vmem %s4, 4
    %v771 = vld [vmem:[%s770] sm:$0x1]
    %v772 = vmul.f32 %v753, %v769
    %v773 = vsub.f32 %v771, %v772
    %v775 = vlaneseq
    %v776 = vshrl.u32 %v775, 7
    %v777 = vsub.s32 0, %v776
    %v778 = vrot.slane %v769, %v777
    %v780 = vmul.f32 %v741, %v778
    %v782 = vlaneseq
    %v783 = vshrl.u32 %v782, 7
    %v784 = vsub.s32 0, %v783
    %v785 = vrot.slane %v773, %v784
    %v787 = vadd.f32 %v780, %v785
    %v788 = vadd.f32 %v787, %v746
    %v789 = vmax.f32 %v788, 0.0
    %v790 = vpack.c.bf16 %v789, %v789
    %s791 = scalar_lea.vmem [#allocation5], 256
    %v792 = vld [vmem:[%s791] sm:$0xf]
    %v793 = vld [vmem:[%s791 + $0x4] sm:$0xf]
    %v794 = vld [vmem:[%s791 + $0x8] sm:$0xf]
    %v795 = vld [vmem:[%s791 + $0xc] sm:$0xf]
    %v796 = vld [vmem:[%s791 + $0x10] sm:$0xf]
    %v797 = vld [vmem:[%s791 + $0x14] sm:$0xf]
    %v798 = vld [vmem:[%s791 + $0x18] sm:$0xf]
    %v799 = vld [vmem:[%s791 + $0x1c] sm:$0xf]
    %v800 = vld [vmem:[%s791 + $0x20] sm:$0xf]
    %v801 = vld [vmem:[%s791 + $0x24] sm:$0xf]
    %v802 = vld [vmem:[%s791 + $0x28] sm:$0xf]
    %v803 = vld [vmem:[%s791 + $0x2c] sm:$0xf]
    %v804 = vld [vmem:[%s791 + $0x30] sm:$0xf]
    %v805 = vld [vmem:[%s791 + $0x34] sm:$0xf]
    %v806 = vld [vmem:[%s791 + $0x38] sm:$0xf]
    %v807 = vld [vmem:[%s791 + $0x3c] sm:$0xf]
    %v824 = vunpack.c.l.b16 %v792
    %v825 = vunpack.c.l.b16 %v793
    %v826 = vunpack.c.l.b16 %v794
    %v827 = vunpack.c.l.b16 %v795
    %v828 = vunpack.c.l.b16 %v796
    %v829 = vunpack.c.l.b16 %v797
    %v830 = vunpack.c.l.b16 %v798
    %v831 = vunpack.c.l.b16 %v799
    %v832 = vunpack.c.l.b16 %v800
    %v833 = vunpack.c.l.b16 %v801
    %v834 = vunpack.c.l.b16 %v802
    %v835 = vunpack.c.l.b16 %v803
    %v836 = vunpack.c.l.b16 %v804
    %v837 = vunpack.c.l.b16 %v805
    %v838 = vunpack.c.l.b16 %v806
    %v839 = vunpack.c.l.b16 %v807
    %v840 = vpack.c.b16 %v825, %v824
    %v841 = vpack.c.b16 %v827, %v826
    %v842 = vpack.c.b16 %v829, %v828
    %v843 = vpack.c.b16 %v831, %v830
    %v844 = vpack.c.b16 %v833, %v832
    %v845 = vpack.c.b16 %v835, %v834
    %v846 = vpack.c.b16 %v837, %v836
    %v847 = vpack.c.b16 %v839, %v838
    %856 = vmatprep.subr.bf16.mxu0 0
    %857 = vmatpush1.bf16.msra.mxu0 %v840
    %858 = vmatprep.subr.bf16.mxu0 0
    %859 = vmatpush1.bf16.msra.mxu0 %v841
    %860 = vmatprep.subr.bf16.mxu0 0
    %861 = vmatpush1.bf16.msra.mxu0 %v842
    %862 = vmatprep.subr.bf16.mxu0 0
    %863 = vmatpush1.bf16.msra.mxu0 %v843
    %864 = vmatprep.subr.bf16.mxu0 0
    %865 = vmatpush1.bf16.msra.mxu0 %v844
    %866 = vmatprep.subr.bf16.mxu0 0
    %867 = vmatpush1.bf16.msra.mxu0 %v845
    %868 = vmatprep.subr.bf16.mxu0 0
    %869 = vmatpush1.bf16.msra.mxu0 %v846
    %870 = vmatprep.subr.bf16.mxu0 0
    %871 = vmatpush1.bf16.msra.mxu0 %v847
    %872 = vmatprep.subr.bf16.mxu0 0
    %873 = vmatpush1.bf16.msra.mxu0 0
    %874 = vmatprep.subr.bf16.mxu0 0
    %875 = vmatpush1.bf16.msra.mxu0 0
    %876 = vmatprep.subr.bf16.mxu0 0
    %877 = vmatpush1.bf16.msra.mxu0 0
    %878 = vmatprep.subr.bf16.mxu0 0
    %879 = vmatpush1.bf16.msra.mxu0 0
    %880 = vmatprep.subr.bf16.mxu0 0
    %881 = vmatpush1.bf16.msra.mxu0 0
    %882 = vmatprep.subr.bf16.mxu0 0
    %883 = vmatpush1.bf16.msra.mxu0 0
    %884 = vmatprep.subr.bf16.mxu0 0
    %885 = vmatpush1.bf16.msra.mxu0 0
    %886 = vmatprep.subr.bf16.mxu0 0
    %887 = vmatpush1.bf16.msra.mxu0 0
    %888 = vmatprep.mubr.bf16.mxu0 0
    %889 = vmatmul.mubr.bf16.gmra.mrb[0].mxu0 %v790
    %v890 = vpop.f32.mrb[0].mxu0
    %v891 = vadd.f32 0.0, %v890
    %v892 = vpop.f32.mrb[0].mxu0
    %v893 = vpop.f32.mrb[0].mxu0
    %v894 = vpop.f32.mrb[0].mxu0
    %895 = vdwg.mxu0
    %v896 = vrot.slane %v891, 4
    %v897 = vadd.f32 %v891, %v896
    %v898 = vrot.slane %v897, 2
    %v899 = vadd.f32 %v897, %v898
    %v900 = vrot.slane %v899, 1
    %v901 = vadd.f32 %v899, %v900
    %v902 = vmul.f32 %v901, 0.125
    %v903 = vmul.f32 %v891, %v891
    %v904 = vrot.slane %v903, 4
    %v905 = vadd.f32 %v903, %v904
    %v906 = vrot.slane %v905, 2
    %v907 = vadd.f32 %v905, %v906
    %v908 = vrot.slane %v907, 1
    %v909 = vadd.f32 %v907, %v908
    %v910 = vmul.f32 %v909, 0.125
    %v911 = vmul.f32 %v902, %v902
    %v912 = vsub.f32 %v910, %v911
    %v913 = vmax.f32 %v912, 0.0
    %s914 = scalar_lea.vmem %s3, 5
    %v915 = vld [vmem:[%s914] sm:$0x1]
    %v916 = vadd.f32 %v913, 1e-05
    %v917 = vrsqrt.pop %v916
    %v918 = vmul.f32 %v915, %v917
    %s919 = scalar_lea.vmem %s4, 5
    %v920 = vld [vmem:[%s919] sm:$0x1]
    %v921 = vmul.f32 %v902, %v918
    %v922 = vsub.f32 %v920, %v921
    %v924 = vlaneseq
    %v925 = vshrl.u32 %v924, 7
    %v926 = vsub.s32 0, %v925
    %v927 = vrot.slane %v918, %v926
    %v929 = vmul.f32 %v891, %v927
    %v931 = vlaneseq
    %v932 = vshrl.u32 %v931, 7
    %v933 = vsub.s32 0, %v932
    %v934 = vrot.slane %v922, %v933
    %v936 = vadd.f32 %v929, %v934
    %v937 = vmax.f32 %v936, 0.0
    %v938 = vpack.c.bf16 %v937, %v937
    %s939 = scalar_lea.vmem [#allocation5], 320
    %v940 = vld [vmem:[%s939] sm:$0xf]
    %v941 = vld [vmem:[%s939 + $0x4] sm:$0xf]
    %v942 = vld [vmem:[%s939 + $0x8] sm:$0xf]
    %v943 = vld [vmem:[%s939 + $0xc] sm:$0xf]
    %v944 = vld [vmem:[%s939 + $0x10] sm:$0xf]
    %v945 = vld [vmem:[%s939 + $0x14] sm:$0xf]
    %v946 = vld [vmem:[%s939 + $0x18] sm:$0xf]
    %v947 = vld [vmem:[%s939 + $0x1c] sm:$0xf]
    %v948 = vld [vmem:[%s939 + $0x20] sm:$0xf]
    %v949 = vld [vmem:[%s939 + $0x24] sm:$0xf]
    %v950 = vld [vmem:[%s939 + $0x28] sm:$0xf]
    %v951 = vld [vmem:[%s939 + $0x2c] sm:$0xf]
    %v952 = vld [vmem:[%s939 + $0x30] sm:$0xf]
    %v953 = vld [vmem:[%s939 + $0x34] sm:$0xf]
    %v954 = vld [vmem:[%s939 + $0x38] sm:$0xf]
    %v955 = vld [vmem:[%s939 + $0x3c] sm:$0xf]
    %v972 = vunpack.c.l.b16 %v940
    %v973 = vunpack.c.l.b16 %v941
    %v974 = vunpack.c.l.b16 %v942
    %v975 = vunpack.c.l.b16 %v943
    %v976 = vunpack.c.l.b16 %v944
    %v977 = vunpack.c.l.b16 %v945
    %v978 = vunpack.c.l.b16 %v946
    %v979 = vunpack.c.l.b16 %v947
    %v980 = vunpack.c.l.b16 %v948
    %v981 = vunpack.c.l.b16 %v949
    %v982 = vunpack.c.l.b16 %v950
    %v983 = vunpack.c.l.b16 %v951
    %v984 = vunpack.c.l.b16 %v952
    %v985 = vunpack.c.l.b16 %v953
    %v986 = vunpack.c.l.b16 %v954
    %v987 = vunpack.c.l.b16 %v955
    %v988 = vpack.c.b16 %v973, %v972
    %v989 = vpack.c.b16 %v975, %v974
    %v990 = vpack.c.b16 %v977, %v976
    %v991 = vpack.c.b16 %v979, %v978
    %v992 = vpack.c.b16 %v981, %v980
    %v993 = vpack.c.b16 %v983, %v982
    %v994 = vpack.c.b16 %v985, %v984
    %v995 = vpack.c.b16 %v987, %v986
    %1004 = vmatprep.subr.bf16.mxu0 0
    %1005 = vmatpush1.bf16.msra.mxu0 %v988
    %1006 = vmatprep.subr.bf16.mxu0 0
    %1007 = vmatpush1.bf16.msra.mxu0 %v989
    %1008 = vmatprep.subr.bf16.mxu0 0
    %1009 = vmatpush1.bf16.msra.mxu0 %v990
    %1010 = vmatprep.subr.bf16.mxu0 0
    %1011 = vmatpush1.bf16.msra.mxu0 %v991
    %1012 = vmatprep.subr.bf16.mxu0 0
    %1013 = vmatpush1.bf16.msra.mxu0 %v992
    %1014 = vmatprep.subr.bf16.mxu0 0
    %1015 = vmatpush1.bf16.msra.mxu0 %v993
    %1016 = vmatprep.subr.bf16.mxu0 0
    %1017 = vmatpush1.bf16.msra.mxu0 %v994
    %1018 = vmatprep.subr.bf16.mxu0 0
    %1019 = vmatpush1.bf16.msra.mxu0 %v995
    %1020 = vmatprep.subr.bf16.mxu0 0
    %1021 = vmatpush1.bf16.msra.mxu0 0
    %1022 = vmatprep.subr.bf16.mxu0 0
    %1023 = vmatpush1.bf16.msra.mxu0 0
    %1024 = vmatprep.subr.bf16.mxu0 0
    %1025 = vmatpush1.bf16.msra.mxu0 0
    %1026 = vmatprep.subr.bf16.mxu0 0
    %1027 = vmatpush1.bf16.msra.mxu0 0
    %1028 = vmatprep.subr.bf16.mxu0 0
    %1029 = vmatpush1.bf16.msra.mxu0 0
    %1030 = vmatprep.subr.bf16.mxu0 0
    %1031 = vmatpush1.bf16.msra.mxu0 0
    %1032 = vmatprep.subr.bf16.mxu0 0
    %1033 = vmatpush1.bf16.msra.mxu0 0
    %1034 = vmatprep.subr.bf16.mxu0 0
    %1035 = vmatpush1.bf16.msra.mxu0 0
    %1036 = vmatprep.mubr.bf16.mxu0 0
    %1037 = vmatmul.mubr.bf16.gmra.mrb[0].mxu0 %v938
    %v1038 = vpop.f32.mrb[0].mxu0
    %v1039 = vadd.f32 0.0, %v1038
    %v1040 = vpop.f32.mrb[0].mxu0
    %v1041 = vpop.f32.mrb[0].mxu0
    %v1042 = vpop.f32.mrb[0].mxu0
    %1043 = vdwg.mxu0
    %v1044 = vunpack.c.l.bf16 %v790
    %v1045 = vrot.slane %v1039, 4
    %v1046 = vadd.f32 %v1039, %v1045
    %v1047 = vrot.slane %v1046, 2
    %v1048 = vadd.f32 %v1046, %v1047
    %v1049 = vrot.slane %v1048, 1
    %v1050 = vadd.f32 %v1048, %v1049
    %v1051 = vmul.f32 %v1050, 0.125
    %v1052 = vmul.f32 %v1039, %v1039
    %v1053 = vrot.slane %v1052, 4
    %v1054 = vadd.f32 %v1052, %v1053
    %v1055 = vrot.slane %v1054, 2
    %v1056 = vadd.f32 %v1054, %v1055
    %v1057 = vrot.slane %v1056, 1
    %v1058 = vadd.f32 %v1056, %v1057
    %v1059 = vmul.f32 %v1058, 0.125
    %v1060 = vmul.f32 %v1051, %v1051
    %v1061 = vsub.f32 %v1059, %v1060
    %v1062 = vmax.f32 %v1061, 0.0
    %s1063 = scalar_lea.vmem %s3, 6
    %v1064 = vld [vmem:[%s1063] sm:$0x1]
    %v1065 = vadd.f32 %v1062, 1e-05
    %v1066 = vrsqrt.pop %v1065
    %v1067 = vmul.f32 %v1064, %v1066
    %s1068 = scalar_lea.vmem %s4, 6
    %v1069 = vld [vmem:[%s1068] sm:$0x1]
    %v1070 = vmul.f32 %v1051, %v1067
    %v1071 = vsub.f32 %v1069, %v1070
    %v1073 = vlaneseq
    %v1074 = vshrl.u32 %v1073, 7
    %v1075 = vsub.s32 0, %v1074
    %v1076 = vrot.slane %v1067, %v1075
    %v1078 = vmul.f32 %v1039, %v1076
    %v1080 = vlaneseq
    %v1081 = vshrl.u32 %v1080, 7
    %v1082 = vsub.s32 0, %v1081
    %v1083 = vrot.slane %v1071, %v1082
    %v1085 = vadd.f32 %v1078, %v1083
    %v1086 = vadd.f32 %v1085, %v1044
    %v1087 = vmax.f32 %v1086, 0.0
    %v1088 = vpack.c.bf16 %v1087, %v1087
    %s1089 = scalar_lea.vmem [#allocation5], 384
    %v1090 = vld [vmem:[%s1089] sm:$0xf]
    %v1091 = vld [vmem:[%s1089 + $0x4] sm:$0xf]
    %v1092 = vld [vmem:[%s1089 + $0x8] sm:$0xf]
    %v1093 = vld [vmem:[%s1089 + $0xc] sm:$0xf]
    %v1094 = vld [vmem:[%s1089 + $0x10] sm:$0xf]
    %v1095 = vld [vmem:[%s1089 + $0x14] sm:$0xf]
    %v1096 = vld [vmem:[%s1089 + $0x18] sm:$0xf]
    %v1097 = vld [vmem:[%s1089 + $0x1c] sm:$0xf]
    %v1098 = vld [vmem:[%s1089 + $0x20] sm:$0xf]
    %v1099 = vld [vmem:[%s1089 + $0x24] sm:$0xf]
    %v1100 = vld [vmem:[%s1089 + $0x28] sm:$0xf]
    %v1101 = vld [vmem:[%s1089 + $0x2c] sm:$0xf]
    %v1102 = vld [vmem:[%s1089 + $0x30] sm:$0xf]
    %v1103 = vld [vmem:[%s1089 + $0x34] sm:$0xf]
    %v1104 = vld [vmem:[%s1089 + $0x38] sm:$0xf]
    %v1105 = vld [vmem:[%s1089 + $0x3c] sm:$0xf]
    %v1122 = vunpack.c.l.b16 %v1090
    %v1123 = vunpack.c.l.b16 %v1091
    %v1124 = vunpack.c.l.b16 %v1092
    %v1125 = vunpack.c.l.b16 %v1093
    %v1126 = vunpack.c.l.b16 %v1094
    %v1127 = vunpack.c.l.b16 %v1095
    %v1128 = vunpack.c.l.b16 %v1096
    %v1129 = vunpack.c.l.b16 %v1097
    %v1130 = vunpack.c.l.b16 %v1098
    %v1131 = vunpack.c.l.b16 %v1099
    %v1132 = vunpack.c.l.b16 %v1100
    %v1133 = vunpack.c.l.b16 %v1101
    %v1134 = vunpack.c.l.b16 %v1102
    %v1135 = vunpack.c.l.b16 %v1103
    %v1136 = vunpack.c.l.b16 %v1104
    %v1137 = vunpack.c.l.b16 %v1105
    %v1138 = vpack.c.b16 %v1123, %v1122
    %v1139 = vpack.c.b16 %v1125, %v1124
    %v1140 = vpack.c.b16 %v1127, %v1126
    %v1141 = vpack.c.b16 %v1129, %v1128
    %v1142 = vpack.c.b16 %v1131, %v1130
    %v1143 = vpack.c.b16 %v1133, %v1132
    %v1144 = vpack.c.b16 %v1135, %v1134
    %v1145 = vpack.c.b16 %v1137, %v1136
    %1154 = vmatprep.subr.bf16.mxu0 0
    %1155 = vmatpush1.bf16.msra.mxu0 %v1138
    %1156 = vmatprep.subr.bf16.mxu0 0
    %1157 = vmatpush1.bf16.msra.mxu0 %v1139
    %1158 = vmatprep.subr.bf16.mxu0 0
    %1159 = vmatpush1.bf16.msra.mxu0 %v1140
    %1160 = vmatprep.subr.bf16.mxu0 0
    %1161 = vmatpush1.bf16.msra.mxu0 %v1141
    %1162 = vmatprep.subr.bf16.mxu0 0
    %1163 = vmatpush1.bf16.msra.mxu0 %v1142
    %1164 = vmatprep.subr.bf16.mxu0 0
    %1165 = vmatpush1.bf16.msra.mxu0 %v1143
    %1166 = vmatprep.subr.bf16.mxu0 0
    %1167 = vmatpush1.bf16.msra.mxu0 %v1144
    %1168 = vmatprep.subr.bf16.mxu0 0
    %1169 = vmatpush1.bf16.msra.mxu0 %v1145
    %1170 = vmatprep.subr.bf16.mxu0 0
    %1171 = vmatpush1.bf16.msra.mxu0 0
    %1172 = vmatprep.subr.bf16.mxu0 0
    %1173 = vmatpush1.bf16.msra.mxu0 0
    %1174 = vmatprep.subr.bf16.mxu0 0
    %1175 = vmatpush1.bf16.msra.mxu0 0
    %1176 = vmatprep.subr.bf16.mxu0 0
    %1177 = vmatpush1.bf16.msra.mxu0 0
    %1178 = vmatprep.subr.bf16.mxu0 0
    %1179 = vmatpush1.bf16.msra.mxu0 0
    %1180 = vmatprep.subr.bf16.mxu0 0
    %1181 = vmatpush1.bf16.msra.mxu0 0
    %1182 = vmatprep.subr.bf16.mxu0 0
    %1183 = vmatpush1.bf16.msra.mxu0 0
    %1184 = vmatprep.subr.bf16.mxu0 0
    %1185 = vmatpush1.bf16.msra.mxu0 0
    %1186 = vmatprep.mubr.bf16.mxu0 0
    %1187 = vmatmul.mubr.bf16.gmra.mrb[0].mxu0 %v1088
    %v1188 = vpop.f32.mrb[0].mxu0
    %v1189 = vadd.f32 0.0, %v1188
    %v1190 = vpop.f32.mrb[0].mxu0
    %v1191 = vpop.f32.mrb[0].mxu0
    %v1192 = vpop.f32.mrb[0].mxu0
    %1193 = vdwg.mxu0
    %v1194 = vrot.slane %v1189, 4
    %v1195 = vadd.f32 %v1189, %v1194
    %v1196 = vrot.slane %v1195, 2
    %v1197 = vadd.f32 %v1195, %v1196
    %v1198 = vrot.slane %v1197, 1
    %v1199 = vadd.f32 %v1197, %v1198
    %v1200 = vmul.f32 %v1199, 0.125
    %v1201 = vmul.f32 %v1189, %v1189
    %v1202 = vrot.slane %v1201, 4
    %v1203 = vadd.f32 %v1201, %v1202
    %v1204 = vrot.slane %v1203, 2
    %v1205 = vadd.f32 %v1203, %v1204
    %v1206 = vrot.slane %v1205, 1
    %v1207 = vadd.f32 %v1205, %v1206
    %v1208 = vmul.f32 %v1207, 0.125
    %v1209 = vmul.f32 %v1200, %v1200
    %v1210 = vsub.f32 %v1208, %v1209
    %v1211 = vmax.f32 %v1210, 0.0
    %s1212 = scalar_lea.vmem %s3, 7
    %v1213 = vld [vmem:[%s1212] sm:$0x1]
    %v1214 = vadd.f32 %v1211, 1e-05
    %v1215 = vrsqrt.pop %v1214
    %v1216 = vmul.f32 %v1213, %v1215
    %s1217 = scalar_lea.vmem %s4, 7
    %v1218 = vld [vmem:[%s1217] sm:$0x1]
    %v1219 = vmul.f32 %v1200, %v1216
    %v1220 = vsub.f32 %v1218, %v1219
    %v1222 = vlaneseq
    %v1223 = vshrl.u32 %v1222, 7
    %v1224 = vsub.s32 0, %v1223
    %v1225 = vrot.slane %v1216, %v1224
    %v1227 = vmul.f32 %v1189, %v1225
    %v1229 = vlaneseq
    %v1230 = vshrl.u32 %v1229, 7
    %v1231 = vsub.s32 0, %v1230
    %v1232 = vrot.slane %v1220, %v1231
    %v1234 = vadd.f32 %v1227, %v1232
    %v1235 = vmax.f32 %v1234, 0.0
    %v1236 = vpack.c.bf16 %v1235, %v1235
    %s1237 = scalar_lea.vmem [#allocation5], 448
    %v1238 = vld [vmem:[%s1237] sm:$0xf]
    %v1239 = vld [vmem:[%s1237 + $0x4] sm:$0xf]
    %v1240 = vld [vmem:[%s1237 + $0x8] sm:$0xf]
    %v1241 = vld [vmem:[%s1237 + $0xc] sm:$0xf]
    %v1242 = vld [vmem:[%s1237 + $0x10] sm:$0xf]
    %v1243 = vld [vmem:[%s1237 + $0x14] sm:$0xf]
    %v1244 = vld [vmem:[%s1237 + $0x18] sm:$0xf]
    %v1245 = vld [vmem:[%s1237 + $0x1c] sm:$0xf]
    %v1246 = vld [vmem:[%s1237 + $0x20] sm:$0xf]
    %v1247 = vld [vmem:[%s1237 + $0x24] sm:$0xf]
    %v1248 = vld [vmem:[%s1237 + $0x28] sm:$0xf]
    %v1249 = vld [vmem:[%s1237 + $0x2c] sm:$0xf]
    %v1250 = vld [vmem:[%s1237 + $0x30] sm:$0xf]
    %v1251 = vld [vmem:[%s1237 + $0x34] sm:$0xf]
    %v1252 = vld [vmem:[%s1237 + $0x38] sm:$0xf]
    %v1253 = vld [vmem:[%s1237 + $0x3c] sm:$0xf]
    %v1270 = vunpack.c.l.b16 %v1238
    %v1271 = vunpack.c.l.b16 %v1239
    %v1272 = vunpack.c.l.b16 %v1240
    %v1273 = vunpack.c.l.b16 %v1241
    %v1274 = vunpack.c.l.b16 %v1242
    %v1275 = vunpack.c.l.b16 %v1243
    %v1276 = vunpack.c.l.b16 %v1244
    %v1277 = vunpack.c.l.b16 %v1245
    %v1278 = vunpack.c.l.b16 %v1246
    %v1279 = vunpack.c.l.b16 %v1247
    %v1280 = vunpack.c.l.b16 %v1248
    %v1281 = vunpack.c.l.b16 %v1249
    %v1282 = vunpack.c.l.b16 %v1250
    %v1283 = vunpack.c.l.b16 %v1251
    %v1284 = vunpack.c.l.b16 %v1252
    %v1285 = vunpack.c.l.b16 %v1253
    %v1286 = vpack.c.b16 %v1271, %v1270
    %v1287 = vpack.c.b16 %v1273, %v1272
    %v1288 = vpack.c.b16 %v1275, %v1274
    %v1289 = vpack.c.b16 %v1277, %v1276
    %v1290 = vpack.c.b16 %v1279, %v1278
    %v1291 = vpack.c.b16 %v1281, %v1280
    %v1292 = vpack.c.b16 %v1283, %v1282
    %v1293 = vpack.c.b16 %v1285, %v1284
    %1302 = vmatprep.subr.bf16.mxu0 0
    %1303 = vmatpush1.bf16.msra.mxu0 %v1286
    %1304 = vmatprep.subr.bf16.mxu0 0
    %1305 = vmatpush1.bf16.msra.mxu0 %v1287
    %1306 = vmatprep.subr.bf16.mxu0 0
    %1307 = vmatpush1.bf16.msra.mxu0 %v1288
    %1308 = vmatprep.subr.bf16.mxu0 0
    %1309 = vmatpush1.bf16.msra.mxu0 %v1289
    %1310 = vmatprep.subr.bf16.mxu0 0
    %1311 = vmatpush1.bf16.msra.mxu0 %v1290
    %1312 = vmatprep.subr.bf16.mxu0 0
    %1313 = vmatpush1.bf16.msra.mxu0 %v1291
    %1314 = vmatprep.subr.bf16.mxu0 0
    %1315 = vmatpush1.bf16.msra.mxu0 %v1292
    %1316 = vmatprep.subr.bf16.mxu0 0
    %1317 = vmatpush1.bf16.msra.mxu0 %v1293
    %1318 = vmatprep.subr.bf16.mxu0 0
    %1319 = vmatpush1.bf16.msra.mxu0 0
    %1320 = vmatprep.subr.bf16.mxu0 0
    %1321 = vmatpush1.bf16.msra.mxu0 0
    %1322 = vmatprep.subr.bf16.mxu0 0
    %1323 = vmatpush1.bf16.msra.mxu0 0
    %1324 = vmatprep.subr.bf16.mxu0 0
    %1325 = vmatpush1.bf16.msra.mxu0 0
    %1326 = vmatprep.subr.bf16.mxu0 0
    %1327 = vmatpush1.bf16.msra.mxu0 0
    %1328 = vmatprep.subr.bf16.mxu0 0
    %1329 = vmatpush1.bf16.msra.mxu0 0
    %1330 = vmatprep.subr.bf16.mxu0 0
    %1331 = vmatpush1.bf16.msra.mxu0 0
    %1332 = vmatprep.subr.bf16.mxu0 0
    %1333 = vmatpush1.bf16.msra.mxu0 0
    %1334 = vmatprep.mubr.bf16.mxu0 0
    %1335 = vmatmul.mubr.bf16.gmra.mrb[0].mxu0 %v1236
    %v1336 = vpop.f32.mrb[0].mxu0
    %v1337 = vadd.f32 0.0, %v1336
    %v1338 = vpop.f32.mrb[0].mxu0
    %v1339 = vpop.f32.mrb[0].mxu0
    %v1340 = vpop.f32.mrb[0].mxu0
    %1341 = vdwg.mxu0
    %v1342 = vunpack.c.l.bf16 %v1088
    %v1343 = vrot.slane %v1337, 4
    %v1344 = vadd.f32 %v1337, %v1343
    %v1345 = vrot.slane %v1344, 2
    %v1346 = vadd.f32 %v1344, %v1345
    %v1347 = vrot.slane %v1346, 1
    %v1348 = vadd.f32 %v1346, %v1347
    %v1349 = vmul.f32 %v1348, 0.125
    %v1350 = vmul.f32 %v1337, %v1337
    %v1351 = vrot.slane %v1350, 4
    %v1352 = vadd.f32 %v1350, %v1351
    %v1353 = vrot.slane %v1352, 2
    %v1354 = vadd.f32 %v1352, %v1353
    %v1355 = vrot.slane %v1354, 1
    %v1356 = vadd.f32 %v1354, %v1355
    %v1357 = vmul.f32 %v1356, 0.125
    %v1358 = vmul.f32 %v1349, %v1349
    %v1359 = vsub.f32 %v1357, %v1358
    %v1360 = vmax.f32 %v1359, 0.0
    %s1361 = scalar_lea.vmem %s3, 8
    %v1362 = vld [vmem:[%s1361] sm:$0x1]
    %v1363 = vadd.f32 %v1360, 1e-05
    %v1364 = vrsqrt.pop %v1363
    %v1365 = vmul.f32 %v1362, %v1364
    %s1366 = scalar_lea.vmem %s4, 8
    %v1367 = vld [vmem:[%s1366] sm:$0x1]
    %v1368 = vmul.f32 %v1349, %v1365
    %v1369 = vsub.f32 %v1367, %v1368
    %v1371 = vlaneseq
    %v1372 = vshrl.u32 %v1371, 7
    %v1373 = vsub.s32 0, %v1372
    %v1374 = vrot.slane %v1365, %v1373
    %v1376 = vmul.f32 %v1337, %v1374
    %v1378 = vlaneseq
    %v1379 = vshrl.u32 %v1378, 7
    %v1380 = vsub.s32 0, %v1379
    %v1381 = vrot.slane %v1369, %v1380
    %v1383 = vadd.f32 %v1376, %v1381
    %v1384 = vadd.f32 %v1383, %v1342
    %v1385 = vmax.f32 %v1384, 0.0
    %1386 = vst [vmem:[#allocation7] sm:$0xff] %v1385
    // Predicated region
    $region30: #{mlp_backbone.1} parent=1 // pred_check
      _
    $region31: #{mlp_backbone.1} parent=1 // pred_check_branch
      %1388 = sbr.rel (0) target = $region33
    $region32: #{mlp_backbone.1} parent=1 // pred_region
      %s1390 = ssub.s32 128, 128
      %1391 = vsyncadd [#allocation4], %s1390
      %s1393 = sshll.u32 [#allocation7], 4
      %s1394 = int_to_ptr.vmem [resolvable:$true] %s1393
      %1396 = dma.vmem_to_hbm [thread:$0]  %s1394, 128, %s5, [#allocation4]
    $region33: #{mlp_backbone.1} parent=1 // pred_fallthru
      _
    // Predicated region
    $region34: #{mlp_backbone.1} parent=1 // pred_check
      _
    $region35: #{mlp_backbone.1} parent=1 // pred_check_branch
      %1398 = sbr.rel (0) target = $region37
    $region36: #{mlp_backbone.1} parent=1 // pred_region
      %1399 = dma.done [#allocation4], 128
    $region37: #{mlp_backbone.1} parent=1 // pred_fallthru
      _
    %1400 = vsyncpa [#allocation3], 1
    %1401 = vsyncpa [#allocation6], 1
    %1402 = vsyncpa [#allocation4], 1

</llo_original>
